<compile_context>
chip_gen: v7x
topology: tpu7x:2x2x1
jax: 0.10.0
libtpu: 0.0.40
codegen_flags: <defaults>
</compile_context>

<pallas_src>
import functools

import jax
import jax.numpy as jnp
from jax import lax
from jax.experimental import pallas as pl
from jax.experimental.pallas import tpu as pltpu

BN_EPS = 1e-5


def _round_up(v, m):
    return (v + m - 1) // m * m


def _tpu_vmem_capacity_bytes():
    """Physical VMEM per TensorCore; conservative 64 MiB fallback (v7x)."""
    try:
        info = pltpu.get_tpu_info()
        cap = getattr(info, "vmem_capacity_bytes", None)
        if cap:
            return int(cap)
    except Exception:
        pass
    return 64 << 20


def _exp_dtype_for_device():
    """bf16 exp on chips with a bf16 EUP (v6e/v7x); f32 on v5 and older."""
    try:
        kind = jax.devices()[0].device_kind.lower()
    except Exception:
        return jnp.float32
    if any(tok in kind for tok in ("v2", "v3", "v4", "v5")):
        return jnp.float32
    return jnp.bfloat16


def _nonlocal_kernel(x_ref, wqkv_ref, ww_ref, bias_ref, o_ref, qkv_ref, *,
                     icp, n_true, tq, instance, exp_dtype):
    """One (batch, query-tile) grid step.

    x_ref    : (1, C, Np)      bf16  full lane-dense input slab (revisited over q)
    wqkv_ref : (3*ICp, C)      bf16  fused g/theta/phi 1x1x1 conv weights (row-padded)
    ww_ref   : (C, ICp)        bf16  W conv weight with BatchNorm folded in (col-padded)
    bias_ref : (3*ICp + C, 1)  f32   [b_g; b_theta; b_phi; BN-folded W bias]
    o_ref    : (1, C, TQ)      bf16  z tile = W_y + x
    qkv_ref  : (3*ICp, Np)     bf16  resident g/theta/phi projections (VMEM scratch)
    """
    q = pl.program_id(1)
    n_pad = qkv_ref.shape[1]

    # Fused projections: computed once per batch element, resident across q tiles.
    @pl.when(q == 0)
    def _():
        x_full = x_ref[0]                                           # (C, Np) bf16
        for s in range(3):                                          # g, theta, phi
            part = jnp.dot(wqkv_ref[s * icp:(s + 1) * icp, :], x_full,
                           preferred_element_type=jnp.float32)
            part = part + bias_ref[s * icp:(s + 1) * icp, :]
            qkv_ref[s * icp:(s + 1) * icp, :] = part.astype(qkv_ref.dtype)

    q0 = pl.multiple_of(q * tq, 128)
    g = qkv_ref[0:icp, :]                                           # (ICp, Np) bf16
    theta_t = qkv_ref[icp:2 * icp, pl.ds(q0, tq)]                   # (ICp, TQ) bf16
    phi = qkv_ref[2 * icp:3 * icp, :]                               # (ICp, Np) bf16

    # f[n, m] = sum_i theta[i, n] * phi[i, m]  -> (TQ, Np) f32
    f = lax.dot_general(theta_t, phi, (((0,), (0,)), ((), ())),
                        preferred_element_type=jnp.float32)

    if n_pad != n_true:   # static: mask padded key columns
        col = lax.broadcasted_iota(jnp.int32, (1, n_pad), 1)
        key_mask = col < n_true
    else:
        key_mask = None

    if instance == "soft":
        if key_mask is not None:
            f = jnp.where(key_mask, f, -jnp.inf)
        m = jnp.max(f, axis=-1, keepdims=True)
        e = jnp.exp((f - m).astype(exp_dtype))                      # bf16 EUP on v6e/v7x
        denom = jnp.sum(e, axis=-1, keepdims=True, dtype=jnp.float32)   # (TQ, 1)
        y = lax.dot_general(e.astype(jnp.bfloat16), g, (((1,), (1,)), ((), ())),
                            preferred_element_type=jnp.float32)     # (TQ, ICp)
        # Deferred softmax normalization: scale the (TQ, ICp) result, not (TQ, Np).
        y = y * pl.reciprocal(denom, approx=True)
    else:  # instance == 'dot'
        if key_mask is not None:
            f = jnp.where(key_mask, f, 0.0)
        y = lax.dot_general(f.astype(jnp.bfloat16), g, (((1,), (1,)), ((), ())),
                            preferred_element_type=jnp.float32)     # (TQ, ICp)
        y = y * (1.0 / n_true)                                      # deferred 1/N scale

    # W conv (ICp -> C) with BN folded in; output is lane-dense in TQ.
    wy = lax.dot_general(ww_ref[...], y.astype(jnp.bfloat16),
                         (((1,), (1,)), ((), ())),
                         preferred_element_type=jnp.float32)        # (C, TQ)
    wy = wy + bias_ref[3 * icp:, :]

    # Residual add on the current tile only; single rounding to bf16 on the way out.
    x_tile = x_ref[0, :, pl.ds(q0, tq)]                             # (C, TQ) bf16
    o_ref[0] = (x_tile.astype(jnp.float32) + wy).astype(o_ref.dtype)


@functools.partial(jax.jit, static_argnames=("instance",))
def nonlocal_forward(x, params, instance="soft"):
    """z = NonLocalBlock(x) for x of shape (B, C, T, H, W) (bn_layer=True, no sub_sample)."""
    b, c, t, h, w = x.shape
    n = t * h * w
    ic = params["wg"].shape[0]
    icp = _round_up(ic, 16)            # bf16 sublane-tile aligned scratch slices

    vmem_cap = _tpu_vmem_capacity_bytes()
    tq_target = 256 if vmem_cap <= (96 << 20) else 512

    # Pad N to a multiple of 128 (lane-dense) and pick the largest query tile <= target
    # that keeps padding overhead small.
    n128 = _round_up(n, 128)
    tq, n_pad = 128, n128
    for cand in (512, 384, 256, 128):
        if cand > tq_target:
            continue
        npc = _round_up(n, cand)
        if npc * 8 <= n128 * 9:        # allow <= ~12.5% padding overhead
            tq, n_pad = cand, npc
            break

    def pad_rows(a, rows):
        return jnp.zeros((rows,) + a.shape[1:], a.dtype).at[:a.shape[0]].set(a)

    # Fuse the three 1x1x1 convs into one (3*ICp, C) weight + packed biases.
    wqkv = jnp.concatenate([pad_rows(params["wg"], icp),
                            pad_rows(params["wt"], icp),
                            pad_rows(params["wp"], icp)], axis=0).astype(jnp.bfloat16)
    bqkv = jnp.concatenate([pad_rows(params["bg"], icp),
                            pad_rows(params["bt"], icp),
                            pad_rows(params["bp"], icp)], axis=0).astype(jnp.float32)

    # Fold BatchNorm3d (eval running stats) into the W conv.
    scale = params["gamma"] / jnp.sqrt(params["var"] + BN_EPS)             # (C, 1)
    shift = params["beta"] - params["mean"] * scale                        # (C, 1)
    wwf = jnp.zeros((c, icp), jnp.float32).at[:, :ic].set(params["ww"] * scale)
    wwf = wwf.astype(jnp.bfloat16)
    bwf = (params["bw"] * scale + shift).astype(jnp.float32)               # (C, 1)
    bias_pack = jnp.concatenate([bqkv, bwf], axis=0)                       # (3*ICp + C, 1)

    # bf16, lane-dense (B, C, Npad) slab for HBM I/O; zero-pad the N tail.
    x2 = x.reshape(b, c, n).astype(jnp.bfloat16)
    if n_pad != n:
        x2 = jnp.pad(x2, ((0, 0), (0, 0), (0, n_pad - n)))

    # VMEM budget from the actual blocks (floor 32 MiB, ceiling 85% of physical VMEM).
    est = (2 * c * n_pad * 2                 # x slab (worst-case double buffered)
           + 2 * c * tq * 2                  # output tile
           + 2 * 3 * icp * c * 2             # fused qkv weight
           + 2 * c * icp * 2                 # W weight
           + 2 * (3 * icp + c) * 128 * 4     # packed bias (lane padded)
           + 3 * icp * n_pad * 2             # resident bf16 qkv scratch
           + icp * n_pad * 4                 # f32 temp for one projection at q == 0
           + 3 * tq * n_pad * 4              # f / e tiles (f32)
           + tq * icp * 4 + 2 * c * tq * 4)  # y, wy, residual tile
    vmem_limit = int(min(max(int(est * 1.4), 32 << 20), int(vmem_cap * 0.85)))

    flops = int(b * (2 * 3 * icp * c * n_pad          # fused qkv
                     + 2 * 2 * icp * n_pad * n_pad    # f and y
                     + 2 * c * icp * n_pad))          # W conv
    transcendentals = int(b * n_pad * n_pad) if instance == "soft" else 0
    bytes_accessed = int(2 * b * c * n_pad * 2
                         + (3 * icp * c + c * icp) * 2 + (3 * icp + c) * 4)
    cost = pl.CostEstimate(flops=flops, transcendentals=transcendentals,
                           bytes_accessed=bytes_accessed)

    kern = functools.partial(_nonlocal_kernel, icp=icp, n_true=n, tq=tq,
                             instance=instance, exp_dtype=_exp_dtype_for_device())

    out = pl.pallas_call(
        kern,
        out_shape=jax.ShapeDtypeStruct((b, c, n_pad), jnp.bfloat16),
        grid=(b, n_pad // tq),
        in_specs=[
            pl.BlockSpec((1, c, n_pad), lambda bi, qi: (bi, 0, 0)),   # full x slab per batch
            pl.BlockSpec((3 * icp, c), lambda bi, qi: (0, 0)),        # fused qkv weight
            pl.BlockSpec((c, icp), lambda bi, qi: (0, 0)),            # BN-folded W weight
            pl.BlockSpec((3 * icp + c, 1), lambda bi, qi: (0, 0)),    # packed biases
        ],
        out_specs=pl.BlockSpec((1, c, tq), lambda bi, qi: (bi, 0, qi)),
        scratch_shapes=[pltpu.VMEM((3 * icp, n_pad), jnp.bfloat16)],  # resident qkv
        input_output_aliases={0: 0},                                  # write z over x slab
        compiler_params=pltpu.CompilerParams(
            dimension_semantics=("parallel", "arbitrary"),            # q carries the scratch
            vmem_limit_bytes=vmem_limit),
        cost_estimate=cost,
    )(x2, wqkv, wwf, bias_pack)

    if n_pad != n:
        out = out[:, :, :n]
    return out.reshape(b, c, t, h, w)


def init_params(key, in_channels, inter_channels=None):
    """Mirror PyTorch NonLocalBlock init: Conv3d default init, BN affine zero-init."""
    if inter_channels is None:
        inter_channels = max(in_channels // 2, 1)
    ks = jax.random.split(key, 4)

    def conv_init(k, out_c, in_c):
        bound = 1.0 / float(in_c) ** 0.5    # kaiming_uniform(a=sqrt(5)), 1x1x1 kernel
        kw, kb = jax.random.split(k)
        wgt = jax.random.uniform(kw, (out_c, in_c), jnp.float32, -bound, bound)
        bia = jax.random.uniform(kb, (out_c, 1), jnp.float32, -bound, bound)
        return wgt, bia

    wg, bg = conv_init(ks[0], inter_channels, in_channels)
    wt, bt = conv_init(ks[1], inter_channels, in_channels)
    wp, bp = conv_init(ks[2], inter_channels, in_channels)
    ww, bw = conv_init(ks[3], in_channels, inter_channels)
    return dict(
        wg=wg, bg=bg, wt=wt, bt=bt, wp=wp, bp=bp, ww=ww, bw=bw,
        gamma=jnp.zeros((in_channels, 1), jnp.float32),   # nn.init.constant_(W[1].weight, 0)
        beta=jnp.zeros((in_channels, 1), jnp.float32),    # nn.init.constant_(W[1].bias, 0)
        mean=jnp.zeros((in_channels, 1), jnp.float32),    # BN running_mean
        var=jnp.ones((in_channels, 1), jnp.float32),      # BN running_var
    )


def reference(x, p, instance="soft"):
    """Pure-JAX f32 replica of NonLocalBlock.forward (bn_layer=True, eval-mode BN)."""
    b, c, t, h, w = x.shape
    n = t * h * w
    x2 = x.reshape(b, c, n).astype(jnp.float32)
    g = jnp.einsum("oc,bcn->bon", p["wg"], x2) + p["bg"][None]
    th = jnp.einsum("oc,bcn->bon", p["wt"], x2) + p["bt"][None]
    ph = jnp.einsum("oc,bcn->bon", p["wp"], x2) + p["bp"][None]
    f = jnp.einsum("bin,bim->bnm", th, ph)
    if instance == "soft":
        fd = jax.nn.softmax(f, axis=-1)
    else:
        fd = f / f.shape[1]
    y = jnp.einsum("bnm,bim->bni", fd, g)
    wy = jnp.einsum("ci,bni->bcn", p["ww"], y) + p["bw"][None]
    scale = p["gamma"] / jnp.sqrt(p["var"] + BN_EPS)
    wy = wy * scale[None] + (p["beta"] - p["mean"] * scale)[None]
    z = x2 + wy
    return z.reshape(b, c, t, h, w)


if __name__ == "__main__":
    key = jax.random.PRNGKey(0)
    kx, kp, kx2 = jax.random.split(key, 3)

    B, C, T, H, W = 2, 4, 2, 16, 16          # N = T*H*W = 512 (lane-dense)
    IC = C // 2                              # inter_channels = in_channels // 2 (default)

    x = jax.random.normal(kx, (B, C, T, H, W), jnp.float32)
    # Quantize the input once so the f32 reference sees the same bf16 input the kernel does.
    xq = x.astype(jnp.bfloat16).astype(jnp.float32)
    params = init_params(kp, C, IC)

    # 1) Module-faithful init (BN affine == 0  =>  W_y == 0  =>  z == x), exact in bf16.
    z = nonlocal_forward(xq, params, instance="soft")
    jax.block_until_ready(z)
    assert z.dtype == jnp.bfloat16
    assert jnp.allclose(z.astype(jnp.float32), xq, atol=1e-6), "mismatch (zero-BN case)"
    assert jnp.allclose(z.astype(jnp.float32), reference(xq, params), atol=1e-5)

    # 2) Full non-local path with non-zero BN affine params (soft attention).
    params2 = dict(params)
    params2["gamma"] = jnp.linspace(0.5, 1.5, C, dtype=jnp.float32).reshape(C, 1)
    params2["beta"] = jnp.linspace(-0.1, 0.1, C, dtype=jnp.float32).reshape(C, 1)
    z2 = nonlocal_forward(xq, params2, instance="soft")
    jax.block_until_ready(z2)
    err2 = float(jnp.max(jnp.abs(z2.astype(jnp.float32) - reference(xq, params2, "soft"))))
    assert err2 < 0.1, f"mismatch (soft path): max abs err {err2}"

    # 3) instance='dot' branch.
    z3 = nonlocal_forward(xq, params2, instance="dot")
    jax.block_until_ready(z3)
    err3 = float(jnp.max(jnp.abs(z3.astype(jnp.float32) - reference(xq, params2, "dot"))))
    assert err3 < 0.1, f"mismatch (dot path): max abs err {err3}"

    # 4) Non-lane-aligned N (N = 2*14*14 = 392): exercises the N-padding + key mask.
    x4 = jax.random.normal(kx2, (B, C, 2, 14, 14), jnp.float32)
    x4q = x4.astype(jnp.bfloat16).astype(jnp.float32)
    z4 = nonlocal_forward(x4q, params2, instance="soft")
    jax.block_until_ready(z4)
    err4 = float(jnp.max(jnp.abs(z4.astype(jnp.float32) - reference(x4q, params2, "soft"))))
    assert err4 < 0.1, f"mismatch (padded soft path): max abs err {err4}"

    z5 = nonlocal_forward(x4q, params2, instance="dot")
    jax.block_until_ready(z5)
    err5 = float(jnp.max(jnp.abs(z5.astype(jnp.float32) - reference(x4q, params2, "dot"))))
    assert err5 < 0.1, f"mismatch (padded dot path): max abs err {err5}"

    print("KERNEL_OK")
</pallas_src>

<mosaic_0001>
module attributes {stable_mosaic.version = 11 : i64} {
  func.func @_nonlocal_kernel(%arg0: i32, %arg1: i32, %arg2: memref<1x4x512xbf16, #tpu.memory_space<vmem>>, %arg3: memref<48x4xbf16, #tpu.memory_space<vmem>>, %arg4: memref<4x16xbf16, #tpu.memory_space<vmem>>, %arg5: memref<52x1xf32, #tpu.memory_space<vmem>>, %arg6: memref<1x4x256xbf16, #tpu.memory_space<vmem>>, %arg7: memref<48x512xbf16, #tpu.memory_space<vmem>>) attributes {dimension_semantics = [#tpu.dimension_semantics<parallel>, #tpu.dimension_semantics<arbitrary>], iteration_bounds = array<i64: 2, 2>, scalar_prefetch = 0 : i64, scratch_operands = 1 : i64, tpu.core_type = #tpu.core_type<tc>, window_params = [{transform_indices = @transform_0, window_bounds = array<i64: 1, 4, 512>}, {pipeline_mode = #tpu.pipeline_mode<synchronous>, transform_indices = @transform_1, window_bounds = array<i64: 48, 4>}, {pipeline_mode = #tpu.pipeline_mode<synchronous>, transform_indices = @transform_2, window_bounds = array<i64: 4, 16>}, {pipeline_mode = #tpu.pipeline_mode<synchronous>, transform_indices = @transform_3, window_bounds = array<i64: 52, 1>}, {transform_indices = @transform_4, window_bounds = array<i64: 1, 4, 256>}]} {
    %c0_i32 = arith.constant 0 : i32
    %0 = arith.cmpi eq, %arg1, %c0_i32 : i32
    %1 = arith.extui %0 : i1 to i32
    %c0_i32_0 = arith.constant 0 : i32
    %2 = arith.cmpi ne, %1, %c0_i32_0 : i32
    scf.if %2 {
      %c0_15 = arith.constant 0 : index
      %c0_16 = arith.constant 0 : index
      %c0_17 = arith.constant 0 : index
      %38 = vector.load %arg2[%c0_15, %c0_16, %c0_17] : memref<1x4x512xbf16, #tpu.memory_space<vmem>>, vector<1x4x512xbf16>
      %39 = vector.shape_cast %38 : vector<1x4x512xbf16> to vector<4x512xbf16>
      %c0_18 = arith.constant 0 : index
      %c0_19 = arith.constant 0 : index
      %40 = vector.load %arg3[%c0_18, %c0_19] : memref<48x4xbf16, #tpu.memory_space<vmem>>, vector<16x4xbf16>
      %cst_20 = arith.constant dense<0.000000e+00> : vector<16x512xf32>
      %41 = tpu.matmul %40, %39, %cst_20 {dimension_numbers = #tpu.dot_dimension_numbers<[1], [0], [0], [1], [0, 0, 1, 1], [], []>} : vector<16x4xbf16>, vector<4x512xbf16>, vector<16x512xf32> -> vector<16x512xf32>
      %c0_21 = arith.constant 0 : index
      %c0_22 = arith.constant 0 : index
      %42 = vector.load %arg5[%c0_21, %c0_22] : memref<52x1xf32, #tpu.memory_space<vmem>>, vector<16x1xf32>
      %43 = vector.broadcast %42 : vector<16x1xf32> to vector<16x512xf32>
      %44 = arith.addf %41, %43 : vector<16x512xf32>
      %45 = arith.truncf %44 : vector<16x512xf32> to vector<16x512xbf16>
      %c0_23 = arith.constant 0 : index
      %c0_24 = arith.constant 0 : index
      %46 = vector.load %arg7[%c0_23, %c0_24] : memref<48x512xbf16, #tpu.memory_space<vmem>>, vector<16x512xbf16>
      tpu.vector_store %arg7[%c0_23, %c0_24], %45 {strides = array<i32>} : memref<48x512xbf16, #tpu.memory_space<vmem>>, vector<16x512xbf16>,
      %c16_25 = arith.constant 16 : index
      %c0_26 = arith.constant 0 : index
      %47 = vector.load %arg3[%c16_25, %c0_26] : memref<48x4xbf16, #tpu.memory_space<vmem>>, vector<16x4xbf16>
      %cst_27 = arith.constant dense<0.000000e+00> : vector<16x512xf32>
      %48 = tpu.matmul %47, %39, %cst_27 {dimension_numbers = #tpu.dot_dimension_numbers<[1], [0], [0], [1], [0, 0, 1, 1], [], []>} : vector<16x4xbf16>, vector<4x512xbf16>, vector<16x512xf32> -> vector<16x512xf32>
      %c16_28 = arith.constant 16 : index
      %c0_29 = arith.constant 0 : index
      %49 = vector.load %arg5[%c16_28, %c0_29] : memref<52x1xf32, #tpu.memory_space<vmem>>, vector<16x1xf32>
      %50 = vector.broadcast %49 : vector<16x1xf32> to vector<16x512xf32>
      %51 = arith.addf %48, %50 : vector<16x512xf32>
      %52 = arith.truncf %51 : vector<16x512xf32> to vector<16x512xbf16>
      %c16_30 = arith.constant 16 : index
      %c0_31 = arith.constant 0 : index
      %53 = vector.load %arg7[%c16_30, %c0_31] : memref<48x512xbf16, #tpu.memory_space<vmem>>, vector<16x512xbf16>
      tpu.vector_store %arg7[%c16_30, %c0_31], %52 {strides = array<i32>} : memref<48x512xbf16, #tpu.memory_space<vmem>>, vector<16x512xbf16>,
      %c32_32 = arith.constant 32 : index
      %c0_33 = arith.constant 0 : index
      %54 = vector.load %arg3[%c32_32, %c0_33] : memref<48x4xbf16, #tpu.memory_space<vmem>>, vector<16x4xbf16>
      %cst_34 = arith.constant dense<0.000000e+00> : vector<16x512xf32>
      %55 = tpu.matmul %54, %39, %cst_34 {dimension_numbers = #tpu.dot_dimension_numbers<[1], [0], [0], [1], [0, 0, 1, 1], [], []>} : vector<16x4xbf16>, vector<4x512xbf16>, vector<16x512xf32> -> vector<16x512xf32>
      %c32_35 = arith.constant 32 : index
      %c0_36 = arith.constant 0 : index
      %56 = vector.load %arg5[%c32_35, %c0_36] : memref<52x1xf32, #tpu.memory_space<vmem>>, vector<16x1xf32>
      %57 = vector.broadcast %56 : vector<16x1xf32> to vector<16x512xf32>
      %58 = arith.addf %55, %57 : vector<16x512xf32>
      %59 = arith.truncf %58 : vector<16x512xf32> to vector<16x512xbf16>
      %c32_37 = arith.constant 32 : index
      %c0_38 = arith.constant 0 : index
      %60 = vector.load %arg7[%c32_37, %c0_38] : memref<48x512xbf16, #tpu.memory_space<vmem>>, vector<16x512xbf16>
      tpu.vector_store %arg7[%c32_37, %c0_38], %59 {strides = array<i32>} : memref<48x512xbf16, #tpu.memory_space<vmem>>, vector<16x512xbf16>,
    } else {
    }
    %c256_i32 = arith.constant 256 : i32
    %3 = arith.muli %arg1, %c256_i32 : i32
    %4 = tpu.assume_multiple %3, 128 : i32
    %c0 = arith.constant 0 : index
    %c0_1 = arith.constant 0 : index
    %5 = vector.load %arg7[%c0, %c0_1] : memref<48x512xbf16, #tpu.memory_space<vmem>>, vector<16x512xbf16>
    %c16 = arith.constant 16 : index
    %6 = arith.index_cast %4 : i32 to index
    %7 = vector.load %arg7[%c16, %6] : memref<48x512xbf16, #tpu.memory_space<vmem>>, vector<16x256xbf16>
    %c32 = arith.constant 32 : index
    %c0_2 = arith.constant 0 : index
    %8 = vector.load %arg7[%c32, %c0_2] : memref<48x512xbf16, #tpu.memory_space<vmem>>, vector<16x512xbf16>
    %cst = arith.constant dense<0.000000e+00> : vector<256x512xf32>
    %9 = tpu.matmul %7, %8, %cst {dimension_numbers = #tpu.dot_dimension_numbers<[0], [0], [1], [1], [0, 1, 1, 1], [], []>} : vector<16x256xbf16>, vector<16x512xbf16>, vector<256x512xf32> -> vector<256x512xf32>
    %cst_3 = arith.constant dense<0xFF800000> : vector<256xf32>
    %10 = vector.multi_reduction <maximumf>, %9, %cst_3 [1] : vector<256x512xf32> to vector<256xf32>
    %11 = vector.shape_cast %10 : vector<256xf32> to vector<256x1xf32>
    %12 = vector.broadcast %11 : vector<256x1xf32> to vector<256x512xf32>
    %13 = arith.subf %9, %12 : vector<256x512xf32>
    %14 = arith.truncf %13 : vector<256x512xf32> to vector<256x512xbf16>
    %15 = math.exp %14 : vector<256x512xbf16>
    %16 = arith.extf %15 : vector<256x512xbf16> to vector<256x512xf32>
    %cst_4 = arith.constant dense<0.000000e+00> : vector<256xf32>
    %17 = vector.multi_reduction <add>, %16, %cst_4 [1] : vector<256x512xf32> to vector<256xf32>
    %18 = vector.shape_cast %17 : vector<256xf32> to vector<256x1xf32>
    %cst_5 = arith.constant dense<0.000000e+00> : vector<256x16xf32>
    %19 = tpu.matmul %15, %5, %cst_5 {dimension_numbers = #tpu.dot_dimension_numbers<[1], [1], [0], [0], [0, 0, 1, 0], [], []>} : vector<256x512xbf16>, vector<16x512xbf16>, vector<256x16xf32> -> vector<256x16xf32>
    %20 = tpu.reciprocal %18 {approx = true} : vector<256x1xf32> -> vector<256x1xf32>
    %21 = vector.broadcast %20 : vector<256x1xf32> to vector<256x16xf32>
    %22 = arith.mulf %19, %21 : vector<256x16xf32>
    %c0_6 = arith.constant 0 : index
    %c0_7 = arith.constant 0 : index
    %23 = vector.load %arg4[%c0_6, %c0_7] : memref<4x16xbf16, #tpu.memory_space<vmem>>, vector<4x16xbf16>
    %24 = arith.truncf %22 : vector<256x16xf32> to vector<256x16xbf16>
    %cst_8 = arith.constant dense<0.000000e+00> : vector<4x256xf32>
    %25 = tpu.matmul %23, %24, %cst_8 {dimension_numbers = #tpu.dot_dimension_numbers<[1], [1], [0], [0], [0, 0, 1, 0], [], []>} : vector<4x16xbf16>, vector<256x16xbf16>, vector<4x256xf32> -> vector<4x256xf32>
    %c48 = arith.constant 48 : index
    %c0_9 = arith.constant 0 : index
    %26 = vector.load %arg5[%c48, %c0_9] : memref<52x1xf32, #tpu.memory_space<vmem>>, vector<4x1xf32>
    %27 = vector.broadcast %26 : vector<4x1xf32> to vector<4x256xf32>
    %28 = arith.addf %25, %27 : vector<4x256xf32>
    %c0_10 = arith.constant 0 : index
    %c0_11 = arith.constant 0 : index
    %29 = arith.index_cast %4 : i32 to index
    %30 = vector.load %arg2[%c0_10, %c0_11, %29] : memref<1x4x512xbf16, #tpu.memory_space<vmem>>, vector<1x4x256xbf16>
    %31 = vector.shape_cast %30 : vector<1x4x256xbf16> to vector<4x256xbf16>
    %32 = arith.extf %31 : vector<4x256xbf16> to vector<4x256xf32>
    %33 = arith.addf %32, %28 : vector<4x256xf32>
    %34 = arith.truncf %33 : vector<4x256xf32> to vector<4x256xbf16>
    %c0_12 = arith.constant 0 : index
    %c0_13 = arith.constant 0 : index
    %c0_14 = arith.constant 0 : index
    %35 = vector.load %arg6[%c0_12, %c0_13, %c0_14] : memref<1x4x256xbf16, #tpu.memory_space<vmem>>, vector<1x4x256xbf16>
    %36 = vector.shape_cast %35 : vector<1x4x256xbf16> to vector<4x256xbf16>
    %37 = vector.shape_cast %34 : vector<4x256xbf16> to vector<1x4x256xbf16>
    tpu.vector_store %arg6[%c0_12, %c0_13, %c0_14], %37 {strides = array<i32>} : memref<1x4x256xbf16, #tpu.memory_space<vmem>>, vector<1x4x256xbf16>,
    return
  }
  func.func @transform_0(%arg0: i32, %arg1: i32) -> (i32, i32, i32) {
    %c0_i32 = arith.constant 0 : i32
    %c0_i32_0 = arith.constant 0 : i32
    %c0_i32_1 = arith.constant 0 : i32
    return %arg0, %c0_i32, %c0_i32_0 : i32, i32, i32
  }
  func.func @transform_1(%arg0: i32, %arg1: i32) -> (i32, i32) {
    %c0_i32 = arith.constant 0 : i32
    %c0_i32_0 = arith.constant 0 : i32
    %c0_i32_1 = arith.constant 0 : i32
    return %c0_i32, %c0_i32_0 : i32, i32
  }
  func.func @transform_2(%arg0: i32, %arg1: i32) -> (i32, i32) {
    %c0_i32 = arith.constant 0 : i32
    %c0_i32_0 = arith.constant 0 : i32
    %c0_i32_1 = arith.constant 0 : i32
    return %c0_i32, %c0_i32_0 : i32, i32
  }
  func.func @transform_3(%arg0: i32, %arg1: i32) -> (i32, i32) {
    %c0_i32 = arith.constant 0 : i32
    %c0_i32_0 = arith.constant 0 : i32
    %c0_i32_1 = arith.constant 0 : i32
    return %c0_i32, %c0_i32_0 : i32, i32
  }
  func.func @transform_4(%arg0: i32, %arg1: i32) -> (i32, i32, i32) {
    %c0_i32 = arith.constant 0 : i32
    %c0_i32_0 = arith.constant 0 : i32
    return %arg0, %c0_i32, %arg1 : i32, i32, i32
  }
}

</mosaic_0001>

<llo_original>
// kernel: nonlocal_forward.1
$region0: #{nonlocal_forward.1}
  #allocation0 [shape = 'u32[]', space=smem, size = 0x4, offset = 0x4, fixed_abs, tag = 'smem constant byte address 0x4 - core index']
  #allocation1 [shape = 'u32[144,128]{1,0:T(1,128)}', space=vmem, size = 0x12000, scoped, tag = 'internal scratch']
  #allocation2 [shape = 'bf16[48,512]{1,0:T(16,128)(2,1)}', space=vmem, size = 0xc000, scoped, tag = 'scratch operand']
  %s0 = inlined_call_operand.vmem [shape: bf16[2,4,512], index: 0, kind: input, shape index: {}, may-alias: {0,4}]
  %s1 = inlined_call_operand.vmem [shape: bf16[48,4], index: 1, kind: input, shape index: {}]
  %s2 = inlined_call_operand.vmem [shape: bf16[4,16], index: 2, kind: input, shape index: {}]
  %s3 = inlined_call_operand.vmem [shape: f32[52,1], index: 3, kind: input, shape index: {}]
  %s4 = inlined_call_operand.vmem [shape: bf16[2,4,512], index: 4, kind: output, shape index: {}, may-alias: {0,4}]
  %s5 = sld [smem:[#allocation0]]
  $region53: #{nonlocal_forward.1} parent=0
    _
  %s7 = ssub.s32 1, %s5
  %s8 = scalar_select 0, %s7, %s5
  loop: start=0, step=1, limit=6
  $region2: #{nonlocal_forward.1} parent=0 // loop_pre_header
    _
  $region3: #{nonlocal_forward.1} parent=0 // loop_header
    %s10 = sphi 0, %s14
    %p11 = scmp.ge.s32.totalorder %s10, 6
    %s17 = sphi 0, %s29
    %s18 = sphi 0, %s25
    %s19 = sphi 0, %s17
    %s20 = sphi 0, %s18
    %s21 = sphi 0, %s19
    %s22 = sphi 0, %s20
    %s32 = sphi 0, %s34
    %s35 = sphi 0, %s32
    %s36 = sphi 0, %s35
    %s52 = sphi 0, %s36
    %s56 = sphi 0, %s56
    %s58 = sphi 0, %s56
    %s59 = sphi 0, %s58
    %s73 = sphi 0, %s59
    %s77 = sphi 0, %s77
    %s79 = sphi 0, %s77
    %s80 = sphi 0, %s79
    %s94 = sphi 0, %s80
    %s98 = sphi 0, %s98
    %s100 = sphi 0, %s98
    %s101 = sphi 0, %s100
    %s115 = sphi 0, %s101
    %s123 = sphi 0, %s125
    %s126 = sphi 0, %s123
    %s127 = sphi 0, %s126
    %s143 = sphi 0, %s127
  $region4: #{nonlocal_forward.1} parent=0 // loop_header_branch
    %13 = sbr.rel (%p11) target = $region8
  $region5: #{nonlocal_forward.1} parent=0 // loop_body
    %s15 = ssub.s32 %s10, 1
    %s16 = ssub.s32 %s10, 2
    %s23 = sadd.s32 1, %s18
    %p24 = scmp.ge.s32.totalorder %s23, 2
    %s25 = scalar_select %p24, 0, %s23
    %s26 = sadd.s32 1, %s17
    %s27 = scalar_select %p24, %s26, %s17
    %p28 = scmp.ge.s32.totalorder %s27, 2
    %s29 = scalar_select %p28, 0, %s27
    %s30 = ssub.s32 %s17, %s29
    %p31 = scmp.eq.s32.totalorder %s30, 0
    %s33 = sadd.s32 %s32, 1
    %s34 = scalar_select %p31, %s32, %s33
    %p37 = pneg %p31
    %p38 = scmp.eq.s32.totalorder %s10, 3
    %p39 = por %p37, %p38
    %p40 = scmp.ne.s32.totalorder %s32, %s35
    %p41 = scmp.eq.s32.totalorder %s10, 0
    %p42 = por %p40, %p41
    %p43 = scmp.ne.s32.totalorder %s32, %s35
    %p44 = scmp.eq.s32.totalorder %s15, 3
    %p45 = por %p43, %p44
    %p46 = scmp.ne.s32.totalorder %s35, %s36
    %p47 = scmp.eq.s32.totalorder %s15, 0
    %p48 = por %p46, %p47
    %p49 = scmp.ne.s32.totalorder %s35, %s36
    %p50 = scmp.eq.s32.totalorder %s16, 3
    %p51 = por %p49, %p50
    %p53 = scmp.ne.s32.totalorder %s36, %s52
    %p54 = scmp.eq.s32.totalorder %s16, 0
    %p55 = por %p53, %p54
    %s57 = sadd.s32 %s56, 1
    %p60 = scmp.eq.s32.totalorder %s10, 3
    %p61 = scmp.ne.s32.totalorder %s56, %s58
    %p62 = scmp.eq.s32.totalorder %s10, 0
    %p63 = por %p61, %p62
    %p64 = scmp.ne.s32.totalorder %s56, %s58
    %p65 = scmp.eq.s32.totalorder %s15, 3
    %p66 = por %p64, %p65
    %p67 = scmp.ne.s32.totalorder %s58, %s59
    %p68 = scmp.eq.s32.totalorder %s15, 0
    %p69 = por %p67, %p68
    %p70 = scmp.ne.s32.totalorder %s58, %s59
    %p71 = scmp.eq.s32.totalorder %s16, 3
    %p72 = por %p70, %p71
    %p74 = scmp.ne.s32.totalorder %s59, %s73
    %p75 = scmp.eq.s32.totalorder %s16, 0
    %p76 = por %p74, %p75
    %s78 = sadd.s32 %s77, 1
    %p81 = scmp.eq.s32.totalorder %s10, 3
    %p82 = scmp.ne.s32.totalorder %s77, %s79
    %p83 = scmp.eq.s32.totalorder %s10, 0
    %p84 = por %p82, %p83
    %p85 = scmp.ne.s32.totalorder %s77, %s79
    %p86 = scmp.eq.s32.totalorder %s15, 3
    %p87 = por %p85, %p86
    %p88 = scmp.ne.s32.totalorder %s79, %s80
    %p89 = scmp.eq.s32.totalorder %s15, 0
    %p90 = por %p88, %p89
    %p91 = scmp.ne.s32.totalorder %s79, %s80
    %p92 = scmp.eq.s32.totalorder %s16, 3
    %p93 = por %p91, %p92
    %p95 = scmp.ne.s32.totalorder %s80, %s94
    %p96 = scmp.eq.s32.totalorder %s16, 0
    %p97 = por %p95, %p96
    %s99 = sadd.s32 %s98, 1
    %p102 = scmp.eq.s32.totalorder %s10, 3
    %p103 = scmp.ne.s32.totalorder %s98, %s100
    %p104 = scmp.eq.s32.totalorder %s10, 0
    %p105 = por %p103, %p104
    %p106 = scmp.ne.s32.totalorder %s98, %s100
    %p107 = scmp.eq.s32.totalorder %s15, 3
    %p108 = por %p106, %p107
    %p109 = scmp.ne.s32.totalorder %s100, %s101
    %p110 = scmp.eq.s32.totalorder %s15, 0
    %p111 = por %p109, %p110
    %p112 = scmp.ne.s32.totalorder %s100, %s101
    %p113 = scmp.eq.s32.totalorder %s16, 3
    %p114 = por %p112, %p113
    %p116 = scmp.ne.s32.totalorder %s101, %s115
    %p117 = scmp.eq.s32.totalorder %s16, 0
    %p118 = por %p116, %p117
    %s119 = ssub.s32 %s17, %s29
    %s120 = ssub.s32 %s18, %s25
    %s121 = sor.u32 %s119, %s120
    %p122 = scmp.eq.s32.totalorder %s121, 0
    %s124 = sadd.s32 %s123, 1
    %s125 = scalar_select %p122, %s123, %s124
    %p128 = pneg %p122
    %p129 = scmp.eq.s32.totalorder %s10, 3
    %p130 = por %p128, %p129
    %p131 = scmp.ne.s32.totalorder %s123, %s126
    %p132 = scmp.eq.s32.totalorder %s10, 0
    %p133 = por %p131, %p132
    %p134 = scmp.ne.s32.totalorder %s123, %s126
    %p135 = scmp.eq.s32.totalorder %s15, 3
    %p136 = por %p134, %p135
    %p137 = scmp.ne.s32.totalorder %s126, %s127
    %p138 = scmp.eq.s32.totalorder %s15, 0
    %p139 = por %p137, %p138
    %p140 = scmp.ne.s32.totalorder %s126, %s127
    %p141 = scmp.eq.s32.totalorder %s16, 3
    %p142 = por %p140, %p141
    %p144 = scmp.ne.s32.totalorder %s127, %s143
    %p145 = scmp.eq.s32.totalorder %s16, 0
    %p146 = por %p144, %p145
    %p147 = scmp.le.s32.totalorder 1, %s10
    %p148 = scmp.lt.s32.totalorder %s10, 5
    %p149 = pnand %p147, %p148
    %p150 = pneg %p149
    // Predicated region
    $region9: #{nonlocal_forward.1} parent=5 // pred_check
      _
    $region10: #{nonlocal_forward.1} parent=5 // pred_check_branch
      %152 = sbr.rel (%p149) target = $region12
    $region11: #{nonlocal_forward.1} parent=5 // pred_region
      %s153 = ssub.s32 %s10, 1
      // Predicated region
      $region13: #{nonlocal_forward.1} parent=11 // pred_check
        %p154 = pneg %p69
      $region14: #{nonlocal_forward.1} parent=11 // pred_check_branch
        %156 = sbr.rel (%p154) target = $region16
      $region15: #{nonlocal_forward.1} parent=11 // pred_region
        _
      $region16: #{nonlocal_forward.1} parent=11 // pred_fallthru
        _
      // Predicated region
      $region17: #{nonlocal_forward.1} parent=11 // pred_check
        %p157 = pneg %p90
      $region18: #{nonlocal_forward.1} parent=11 // pred_check_branch
        %159 = sbr.rel (%p157) target = $region20
      $region19: #{nonlocal_forward.1} parent=11 // pred_region
        _
      $region20: #{nonlocal_forward.1} parent=11 // pred_fallthru
        _
      // Predicated region
      $region21: #{nonlocal_forward.1} parent=11 // pred_check
        %p160 = pneg %p111
      $region22: #{nonlocal_forward.1} parent=11 // pred_check_branch
        %162 = sbr.rel (%p160) target = $region24
      $region23: #{nonlocal_forward.1} parent=11 // pred_region
        _
      $region24: #{nonlocal_forward.1} parent=11 // pred_fallthru
        _
    $region12: #{nonlocal_forward.1} parent=5 // pred_fallthru
      _
    %p163 = scmp.lt.s32.totalorder %s10, 4
    // Predicated region
    $region25: #{nonlocal_forward.1} parent=5 // pred_check
      %p164 = pneg %p163
    $region26: #{nonlocal_forward.1} parent=5 // pred_check_branch
      %166 = sbr.rel (%p164) target = $region28
    $region27: #{nonlocal_forward.1} parent=5 // pred_region
      // Predicated region
      $region29: #{nonlocal_forward.1} parent=27 // pred_check
        %p167 = pneg %p42
      $region30: #{nonlocal_forward.1} parent=27 // pred_check_branch
        %169 = sbr.rel (%p167) target = $region32
      $region31: #{nonlocal_forward.1} parent=27 // pred_region
        %p170 = scmp.lt.s32.totalorder %s17, 1
        %s171 = scalar_select %p170, %s17, 1
        %s172 = smul.addr %s171, 4
        %s173 = smul.addr %s172, 2
        %s174 = scalar_lea.vmem %s0, %s173
      $region32: #{nonlocal_forward.1} parent=27 // pred_fallthru
        _
    $region28: #{nonlocal_forward.1} parent=5 // pred_fallthru
      _
    %p175 = scmp.le.s32.totalorder 1, %s10
    %p176 = scmp.lt.s32.totalorder %s10, 5
    %p177 = pnand %p175, %p176
    %p178 = pneg %p177
    // Predicated region
    $region33: #{nonlocal_forward.1} parent=5 // pred_check
      _
    $region34: #{nonlocal_forward.1} parent=5 // pred_check_branch
      %180 = sbr.rel (%p177) target = $region36
    $region35: #{nonlocal_forward.1} parent=5 // pred_region
      %s181 = ssub.s32 %s10, 1
      %p182 = scmp.lt.s32.totalorder %s19, 1
      %s183 = scalar_select %p182, %s19, 1
      %s184 = smul.addr %s183, 4
      %s185 = smul.addr %s184, 2
      %s186 = scalar_lea.vmem %s0, %s185
      %p187 = pneg %p48
      %p188 = pneg %p45
      %p189 = pneg %p69
      %p190 = pneg %p66
      %p191 = pneg %p90
      %p192 = pneg %p87
      %p193 = pneg %p111
      %p194 = pneg %p108
      %p195 = pneg %p139
      %p196 = pneg %p136
      %s197 = smul.u32 2, %s20
      %p198 = scmp.lt.s32.totalorder %s19, 1
      %s199 = scalar_select %p198, %s19, 1
      %p200 = scmp.lt.s32.totalorder %s197, 3
      %s201 = scalar_select %p200, %s197, 3
      %s202 = smul.addr %s199, 4
      %s203 = sadd.s32 %s201, %s202
      %s204 = smul.addr %s203, 2
      %s205 = scalar_lea.vmem %s4, %s204
      %p206 = scmp.lt.s32.totalorder %s19, 1
      %s207 = scalar_select %p206, %s19, 1
      %s208 = smul.addr %s207, 4
      %s209 = smul.addr %s208, 2
      %s210 = scalar_lea.vmem %s0, %s209
      %s211 = smul.u32 2, %s20
      %p212 = scmp.lt.s32.totalorder %s19, 1
      %s213 = scalar_select %p212, %s19, 1
      %p214 = scmp.lt.s32.totalorder %s211, 3
      %s215 = scalar_select %p214, %s211, 3
      %s216 = smul.addr %s213, 4
      %s217 = sadd.s32 %s215, %s216
      %s218 = smul.addr %s217, 2
      %s219 = scalar_lea.vmem %s4, %s218
      %s220 = smul.u32 2, %s20
      %p222 = scmp.eq.s32.totalorder %s20, 0
      // Predicated region
      $region37: #{nonlocal_forward.1} parent=35 // pred_check
        %p223 = pneg %p222
      $region38: #{nonlocal_forward.1} parent=35 // pred_check_branch
        %225 = sbr.rel (%p223) target = $region40
      $region39: #{nonlocal_forward.1} parent=35 // pred_region
        %v226 = vld [vmem:[%s210] sm:$0xff]
        %v227 = vld [vmem:[%s1] sm:$0xf]
        %v228 = vld [vmem:[%s1 + $0x4] sm:$0xf]
        %v229 = vld [vmem:[%s3] sm:$0xff]
        %v230 = vld [vmem:[%s3 + $0x8] sm:$0xff]
        %232 = vset.pattern.permute.xlu0 0
        %233 = vperm.xlu0 %232, %v229
        %v234 = vpop.permute.xlu0 %233
        %237 = vset.pattern.permute.xlu0 0
        %238 = vperm.xlu0 %237, %v230
        %v239 = vpop.permute.xlu0 %238
        %v243 = vunpack.c.l.b16 %v227
        %v244 = vunpack.c.l.b16 %v228
        %v245 = vpack.c.b16 %v244, %v243
        %v247 = vcombine.high %v226, %v226
        %v249 = vunpack.c.l.s4 1983009808
        %v250 = vunpack.c.0.s8 %v249
        %v251 = vlaneseq
        %v252 = vshrl.u32 %v251, 7
        %v253 = vsub.s32 %v250, %v252
        %v254 = vrot.slane %v226, %v253
        %v256 = vunpack.c.l.s4 1983009808
        %v257 = vunpack.c.0.s8 %v256
        %v258 = vlaneseq
        %v259 = vshrl.u32 %v258, 7
        %v260 = vsub.s32 %v257, %v259
        %v261 = vrot.slane %v247, %v260
        %v262 = vcombine.high %v254, %v254
        %v263 = vcombine.high %v261, %v261
        %vm264 = vcmask 31744
        %v266 = vsel %vm264, %v245, 0
        %vm268 = vcmask 1041408
        %v270 = vsel %vm268, %v254, 0
        %v273 = vsel %vm268, %v262, 0
        %v276 = vsel %vm268, %v261, 0
        %v279 = vsel %vm268, %v263, 0
        %281 = vmatprep.subr.bf16.mxu0 %v273
        %282 = vmatpush1.bf16.msra.mxu0 %v270
        %283 = vmatprep.subr.bf16.mxu0 0
        %284 = vmatpush1.bf16.msra.mxu0 0
        %285 = vmatprep.subr.bf16.mxu0 0
        %286 = vmatpush1.bf16.msra.mxu0 0
        %287 = vmatprep.subr.bf16.mxu0 0
        %288 = vmatpush1.bf16.msra.mxu0 0
        %289 = vmatprep.subr.bf16.mxu0 0
        %290 = vmatpush1.bf16.msra.mxu0 0
        %291 = vmatprep.subr.bf16.mxu0 0
        %292 = vmatpush1.bf16.msra.mxu0 0
        %293 = vmatprep.subr.bf16.mxu0 0
        %294 = vmatpush1.bf16.msra.mxu0 0
        %295 = vmatprep.subr.bf16.mxu0 0
        %296 = vmatpush1.bf16.msra.mxu0 0
        %297 = vmatprep.subr.bf16.mxu0 0
        %298 = vmatpush1.bf16.msra.mxu0 0
        %299 = vmatprep.subr.bf16.mxu0 0
        %300 = vmatpush1.bf16.msra.mxu0 0
        %301 = vmatprep.subr.bf16.mxu0 0
        %302 = vmatpush1.bf16.msra.mxu0 0
        %303 = vmatprep.subr.bf16.mxu0 0
        %304 = vmatpush1.bf16.msra.mxu0 0
        %305 = vmatprep.subr.bf16.mxu0 0
        %306 = vmatpush1.bf16.msra.mxu0 0
        %307 = vmatprep.subr.bf16.mxu0 0
        %308 = vmatpush1.bf16.msra.mxu0 0
        %309 = vmatprep.subr.bf16.mxu0 0
        %310 = vmatpush1.bf16.msra.mxu0 0
        %311 = vmatprep.subr.bf16.mxu0 0
        %312 = vmatpush1.bf16.msra.mxu0 0
        %313 = vmatprep.mubr.bf16.mxu0 0
        %314 = vmatmul.mubr.bf16.gmra.mrb[0].mxu0 %v266
        %v315 = vpop.f32.mrb[0].mxu0
        %v316 = vadd.f32 %v234, %v315
        %v317 = vpop.f32.mrb[0].mxu0
        %v318 = vadd.f32 %v234, %v317
        %v319 = vpop.f32.mrb[0].mxu0
        %v320 = vadd.f32 %v239, %v319
        %v321 = vpop.f32.mrb[0].mxu0
        %v322 = vadd.f32 %v239, %v321
        %323 = vdwg.mxu0
        %324 = vmatprep.subr.bf16.mxu0 %v279
        %325 = vmatpush1.bf16.msra.mxu0 %v276
        %326 = vmatprep.subr.bf16.mxu0 0
        %327 = vmatpush1.bf16.msra.mxu0 0
        %328 = vmatprep.subr.bf16.mxu0 0
        %329 = vmatpush1.bf16.msra.mxu0 0
        %330 = vmatprep.subr.bf16.mxu0 0
        %331 = vmatpush1.bf16.msra.mxu0 0
        %332 = vmatprep.subr.bf16.mxu0 0
        %333 = vmatpush1.bf16.msra.mxu0 0
        %334 = vmatprep.subr.bf16.mxu0 0
        %335 = vmatpush1.bf16.msra.mxu0 0
        %336 = vmatprep.subr.bf16.mxu0 0
        %337 = vmatpush1.bf16.msra.mxu0 0
        %338 = vmatprep.subr.bf16.mxu0 0
        %339 = vmatpush1.bf16.msra.mxu0 0
        %340 = vmatprep.subr.bf16.mxu0 0
        %341 = vmatpush1.bf16.msra.mxu0 0
        %342 = vmatprep.subr.bf16.mxu0 0
        %343 = vmatpush1.bf16.msra.mxu0 0
        %344 = vmatprep.subr.bf16.mxu0 0
        %345 = vmatpush1.bf16.msra.mxu0 0
        %346 = vmatprep.subr.bf16.mxu0 0
        %347 = vmatpush1.bf16.msra.mxu0 0
        %348 = vmatprep.subr.bf16.mxu0 0
        %349 = vmatpush1.bf16.msra.mxu0 0
        %350 = vmatprep.subr.bf16.mxu0 0
        %351 = vmatpush1.bf16.msra.mxu0 0
        %352 = vmatprep.subr.bf16.mxu0 0
        %353 = vmatpush1.bf16.msra.mxu0 0
        %354 = vmatprep.subr.bf16.mxu0 0
        %355 = vmatpush1.bf16.msra.mxu0 0
        %356 = vmatprep.mubr.bf16.mxu0 0
        %357 = vmatmul.mubr.bf16.gmra.mrb[0].mxu0 %v266
        %v358 = vpop.f32.mrb[0].mxu0
        %v359 = vadd.f32 %v234, %v358
        %v360 = vpop.f32.mrb[0].mxu0
        %v361 = vadd.f32 %v234, %v360
        %v362 = vpop.f32.mrb[0].mxu0
        %v363 = vadd.f32 %v239, %v362
        %v364 = vpop.f32.mrb[0].mxu0
        %v365 = vadd.f32 %v239, %v364
        %366 = vdwg.mxu0
        %v367 = vpack.c.bf16 %v320, %v316
        %v368 = vpack.c.bf16 %v322, %v318
        %v369 = vpack.c.bf16 %v363, %v359
        %v370 = vpack.c.bf16 %v365, %v361
        %371 = vst [vmem:[#allocation2] sm:$0xff] %v367
        %372 = vst [vmem:[#allocation2 + $0x8] sm:$0xff] %v368
        %373 = vst [vmem:[#allocation2 + $0x10] sm:$0xff] %v369
        %374 = vst [vmem:[#allocation2 + $0x18] sm:$0xff] %v370
        %v375 = vld [vmem:[%s1 + $0x8] sm:$0xf]
        %v376 = vld [vmem:[%s1 + $0xc] sm:$0xf]
        %v377 = vld [vmem:[%s3 + $0x10] sm:$0xff]
        %v378 = vld [vmem:[%s3 + $0x18] sm:$0xff]
        %380 = vset.pattern.permute.xlu0 0
        %381 = vperm.xlu0 %380, %v377
        %v382 = vpop.permute.xlu0 %381
        %385 = vset.pattern.permute.xlu0 0
        %386 = vperm.xlu0 %385, %v378
        %v387 = vpop.permute.xlu0 %386
        %v391 = vunpack.c.l.b16 %v375
        %v392 = vunpack.c.l.b16 %v376
        %v393 = vpack.c.b16 %v392, %v391
        %v395 = vsel %vm264, %v393, 0
        %397 = vmatprep.subr.bf16.mxu0 %v273
        %398 = vmatpush1.bf16.msra.mxu0 %v270
        %399 = vmatprep.subr.bf16.mxu0 0
        %400 = vmatpush1.bf16.msra.mxu0 0
        %401 = vmatprep.subr.bf16.mxu0 0
        %402 = vmatpush1.bf16.msra.mxu0 0
        %403 = vmatprep.subr.bf16.mxu0 0
        %404 = vmatpush1.bf16.msra.mxu0 0
        %405 = vmatprep.subr.bf16.mxu0 0
        %406 = vmatpush1.bf16.msra.mxu0 0
        %407 = vmatprep.subr.bf16.mxu0 0
        %408 = vmatpush1.bf16.msra.mxu0 0
        %409 = vmatprep.subr.bf16.mxu0 0
        %410 = vmatpush1.bf16.msra.mxu0 0
        %411 = vmatprep.subr.bf16.mxu0 0
        %412 = vmatpush1.bf16.msra.mxu0 0
        %413 = vmatprep.subr.bf16.mxu0 0
        %414 = vmatpush1.bf16.msra.mxu0 0
        %415 = vmatprep.subr.bf16.mxu0 0
        %416 = vmatpush1.bf16.msra.mxu0 0
        %417 = vmatprep.subr.bf16.mxu0 0
        %418 = vmatpush1.bf16.msra.mxu0 0
        %419 = vmatprep.subr.bf16.mxu0 0
        %420 = vmatpush1.bf16.msra.mxu0 0
        %421 = vmatprep.subr.bf16.mxu0 0
        %422 = vmatpush1.bf16.msra.mxu0 0
        %423 = vmatprep.subr.bf16.mxu0 0
        %424 = vmatpush1.bf16.msra.mxu0 0
        %425 = vmatprep.subr.bf16.mxu0 0
        %426 = vmatpush1.bf16.msra.mxu0 0
        %427 = vmatprep.subr.bf16.mxu0 0
        %428 = vmatpush1.bf16.msra.mxu0 0
        %429 = vmatprep.mubr.bf16.mxu0 0
        %430 = vmatmul.mubr.bf16.gmra.mrb[0].mxu0 %v395
        %v431 = vpop.f32.mrb[0].mxu0
        %v432 = vadd.f32 %v382, %v431
        %v433 = vpop.f32.mrb[0].mxu0
        %v434 = vadd.f32 %v382, %v433
        %v435 = vpop.f32.mrb[0].mxu0
        %v436 = vadd.f32 %v387, %v435
        %v437 = vpop.f32.mrb[0].mxu0
        %v438 = vadd.f32 %v387, %v437
        %439 = vdwg.mxu0
        %440 = vmatprep.subr.bf16.mxu0 %v279
        %441 = vmatpush1.bf16.msra.mxu0 %v276
        %442 = vmatprep.subr.bf16.mxu0 0
        %443 = vmatpush1.bf16.msra.mxu0 0
        %444 = vmatprep.subr.bf16.mxu0 0
        %445 = vmatpush1.bf16.msra.mxu0 0
        %446 = vmatprep.subr.bf16.mxu0 0
        %447 = vmatpush1.bf16.msra.mxu0 0
        %448 = vmatprep.subr.bf16.mxu0 0
        %449 = vmatpush1.bf16.msra.mxu0 0
        %450 = vmatprep.subr.bf16.mxu0 0
        %451 = vmatpush1.bf16.msra.mxu0 0
        %452 = vmatprep.subr.bf16.mxu0 0
        %453 = vmatpush1.bf16.msra.mxu0 0
        %454 = vmatprep.subr.bf16.mxu0 0
        %455 = vmatpush1.bf16.msra.mxu0 0
        %456 = vmatprep.subr.bf16.mxu0 0
        %457 = vmatpush1.bf16.msra.mxu0 0
        %458 = vmatprep.subr.bf16.mxu0 0
        %459 = vmatpush1.bf16.msra.mxu0 0
        %460 = vmatprep.subr.bf16.mxu0 0
        %461 = vmatpush1.bf16.msra.mxu0 0
        %462 = vmatprep.subr.bf16.mxu0 0
        %463 = vmatpush1.bf16.msra.mxu0 0
        %464 = vmatprep.subr.bf16.mxu0 0
        %465 = vmatpush1.bf16.msra.mxu0 0
        %466 = vmatprep.subr.bf16.mxu0 0
        %467 = vmatpush1.bf16.msra.mxu0 0
        %468 = vmatprep.subr.bf16.mxu0 0
        %469 = vmatpush1.bf16.msra.mxu0 0
        %470 = vmatprep.subr.bf16.mxu0 0
        %471 = vmatpush1.bf16.msra.mxu0 0
        %472 = vmatprep.mubr.bf16.mxu0 0
        %473 = vmatmul.mubr.bf16.gmra.mrb[0].mxu0 %v395
        %v474 = vpop.f32.mrb[0].mxu0
        %v475 = vadd.f32 %v382, %v474
        %v476 = vpop.f32.mrb[0].mxu0
        %v477 = vadd.f32 %v382, %v476
        %v478 = vpop.f32.mrb[0].mxu0
        %v479 = vadd.f32 %v387, %v478
        %v480 = vpop.f32.mrb[0].mxu0
        %v481 = vadd.f32 %v387, %v480
        %482 = vdwg.mxu0
        %v483 = vpack.c.bf16 %v436, %v432
        %v484 = vpack.c.bf16 %v438, %v434
        %v485 = vpack.c.bf16 %v479, %v475
        %v486 = vpack.c.bf16 %v481, %v477
        %487 = vst [vmem:[#allocation2 + $0x20] sm:$0xff] %v483
        %488 = vst [vmem:[#allocation2 + $0x28] sm:$0xff] %v484
        %489 = vst [vmem:[#allocation2 + $0x30] sm:$0xff] %v485
        %490 = vst [vmem:[#allocation2 + $0x38] sm:$0xff] %v486
        %v491 = vld [vmem:[%s1 + $0x10] sm:$0xf]
        %v492 = vld [vmem:[%s1 + $0x14] sm:$0xf]
        %v493 = vld [vmem:[%s3 + $0x20] sm:$0xff]
        %v494 = vld [vmem:[%s3 + $0x28] sm:$0xff]
        %496 = vset.pattern.permute.xlu0 0
        %497 = vperm.xlu0 %496, %v493
        %v498 = vpop.permute.xlu0 %497
        %501 = vset.pattern.permute.xlu0 0
        %502 = vperm.xlu0 %501, %v494
        %v503 = vpop.permute.xlu0 %502
        %v507 = vunpack.c.l.b16 %v491
        %v508 = vunpack.c.l.b16 %v492
        %v509 = vpack.c.b16 %v508, %v507
        %v511 = vsel %vm264, %v509, 0
        %513 = vmatprep.subr.bf16.mxu0 %v273
        %514 = vmatpush1.bf16.msra.mxu0 %v270
        %515 = vmatprep.subr.bf16.mxu0 0
        %516 = vmatpush1.bf16.msra.mxu0 0
        %517 = vmatprep.subr.bf16.mxu0 0
        %518 = vmatpush1.bf16.msra.mxu0 0
        %519 = vmatprep.subr.bf16.mxu0 0
        %520 = vmatpush1.bf16.msra.mxu0 0
        %521 = vmatprep.subr.bf16.mxu0 0
        %522 = vmatpush1.bf16.msra.mxu0 0
        %523 = vmatprep.subr.bf16.mxu0 0
        %524 = vmatpush1.bf16.msra.mxu0 0
        %525 = vmatprep.subr.bf16.mxu0 0
        %526 = vmatpush1.bf16.msra.mxu0 0
        %527 = vmatprep.subr.bf16.mxu0 0
        %528 = vmatpush1.bf16.msra.mxu0 0
        %529 = vmatprep.subr.bf16.mxu0 0
        %530 = vmatpush1.bf16.msra.mxu0 0
        %531 = vmatprep.subr.bf16.mxu0 0
        %532 = vmatpush1.bf16.msra.mxu0 0
        %533 = vmatprep.subr.bf16.mxu0 0
        %534 = vmatpush1.bf16.msra.mxu0 0
        %535 = vmatprep.subr.bf16.mxu0 0
        %536 = vmatpush1.bf16.msra.mxu0 0
        %537 = vmatprep.subr.bf16.mxu0 0
        %538 = vmatpush1.bf16.msra.mxu0 0
        %539 = vmatprep.subr.bf16.mxu0 0
        %540 = vmatpush1.bf16.msra.mxu0 0
        %541 = vmatprep.subr.bf16.mxu0 0
        %542 = vmatpush1.bf16.msra.mxu0 0
        %543 = vmatprep.subr.bf16.mxu0 0
        %544 = vmatpush1.bf16.msra.mxu0 0
        %545 = vmatprep.mubr.bf16.mxu0 0
        %546 = vmatmul.mubr.bf16.gmra.mrb[0].mxu0 %v511
        %v547 = vpop.f32.mrb[0].mxu0
        %v548 = vadd.f32 %v498, %v547
        %v549 = vpop.f32.mrb[0].mxu0
        %v550 = vadd.f32 %v498, %v549
        %v551 = vpop.f32.mrb[0].mxu0
        %v552 = vadd.f32 %v503, %v551
        %v553 = vpop.f32.mrb[0].mxu0
        %v554 = vadd.f32 %v503, %v553
        %555 = vdwg.mxu0
        %556 = vmatprep.subr.bf16.mxu0 %v279
        %557 = vmatpush1.bf16.msra.mxu0 %v276
        %558 = vmatprep.subr.bf16.mxu0 0
        %559 = vmatpush1.bf16.msra.mxu0 0
        %560 = vmatprep.subr.bf16.mxu0 0
        %561 = vmatpush1.bf16.msra.mxu0 0
        %562 = vmatprep.subr.bf16.mxu0 0
        %563 = vmatpush1.bf16.msra.mxu0 0
        %564 = vmatprep.subr.bf16.mxu0 0
        %565 = vmatpush1.bf16.msra.mxu0 0
        %566 = vmatprep.subr.bf16.mxu0 0
        %567 = vmatpush1.bf16.msra.mxu0 0
        %568 = vmatprep.subr.bf16.mxu0 0
        %569 = vmatpush1.bf16.msra.mxu0 0
        %570 = vmatprep.subr.bf16.mxu0 0
        %571 = vmatpush1.bf16.msra.mxu0 0
        %572 = vmatprep.subr.bf16.mxu0 0
        %573 = vmatpush1.bf16.msra.mxu0 0
        %574 = vmatprep.subr.bf16.mxu0 0
        %575 = vmatpush1.bf16.msra.mxu0 0
        %576 = vmatprep.subr.bf16.mxu0 0
        %577 = vmatpush1.bf16.msra.mxu0 0
        %578 = vmatprep.subr.bf16.mxu0 0
        %579 = vmatpush1.bf16.msra.mxu0 0
        %580 = vmatprep.subr.bf16.mxu0 0
        %581 = vmatpush1.bf16.msra.mxu0 0
        %582 = vmatprep.subr.bf16.mxu0 0
        %583 = vmatpush1.bf16.msra.mxu0 0
        %584 = vmatprep.subr.bf16.mxu0 0
        %585 = vmatpush1.bf16.msra.mxu0 0
        %586 = vmatprep.subr.bf16.mxu0 0
        %587 = vmatpush1.bf16.msra.mxu0 0
        %588 = vmatprep.mubr.bf16.mxu0 0
        %589 = vmatmul.mubr.bf16.gmra.mrb[0].mxu0 %v511
        %v590 = vpop.f32.mrb[0].mxu0
        %v591 = vadd.f32 %v498, %v590
        %v592 = vpop.f32.mrb[0].mxu0
        %v593 = vadd.f32 %v498, %v592
        %v594 = vpop.f32.mrb[0].mxu0
        %v595 = vadd.f32 %v503, %v594
        %v596 = vpop.f32.mrb[0].mxu0
        %v597 = vadd.f32 %v503, %v596
        %598 = vdwg.mxu0
        %v599 = vpack.c.bf16 %v552, %v548
        %v600 = vpack.c.bf16 %v554, %v550
        %v601 = vpack.c.bf16 %v595, %v591
        %v602 = vpack.c.bf16 %v597, %v593
        %603 = vst [vmem:[#allocation2 + $0x40] sm:$0xff] %v599
        %604 = vst [vmem:[#allocation2 + $0x48] sm:$0xff] %v600
        %605 = vst [vmem:[#allocation2 + $0x50] sm:$0xff] %v601
        %606 = vst [vmem:[#allocation2 + $0x58] sm:$0xff] %v602
      $region40: #{nonlocal_forward.1} parent=35 // pred_fallthru
        _
      %s607 = smul.u32 %s20, 256
      %v608 = vld [vmem:[#allocation2] sm:$0xff]
      %v609 = vld [vmem:[#allocation2 + $0x8] sm:$0xff]
      %v610 = vld [vmem:[#allocation2 + $0x10] sm:$0xff]
      %v611 = vld [vmem:[#allocation2 + $0x18] sm:$0xff]
      %s612 = sshra.s32 %s607, 7
      %s613 = sand.u32 %s607, 127
      %s614 = smul.addr %s612, 8
      %s615 = scalar_lea.vmem [#allocation2], %s614
      %v616 = vld [vmem:[%s615 + $0x20] sm:$0xff]
      %v617 = vld [vmem:[%s615 + $0x28] sm:$0xff]
      %v618 = vld [vmem:[#allocation2 + $0x40] sm:$0xff]
      %v619 = vld [vmem:[#allocation2 + $0x48] sm:$0xff]
      %v620 = vld [vmem:[#allocation2 + $0x50] sm:$0xff]
      %v621 = vld [vmem:[#allocation2 + $0x58] sm:$0xff]
      %622 = vxpose.xlu0.c.b16.start [1/8] %v616, 128
      %623 = vxpose.xlu0.c.b16.cont [2/8] 0, 128
      %624 = vxpose.xlu0.c.b16.cont [3/8] 0, 128
      %625 = vxpose.xlu0.c.b16.cont [4/8] 0, 128
      %626 = vxpose.xlu0.c.b16.cont [5/8] 0, 128
      %627 = vxpose.xlu0.c.b16.cont [6/8] 0, 128
      %628 = vxpose.xlu0.c.b16.cont [7/8] 0, 128
      %629 = vxpose.xlu0.c.b16.end [8/8] 0, 128
      %v630 = vpop.trf.xlu0
      %v631 = vpop.trf.xlu0
      %v632 = vpop.trf.xlu0
      %v633 = vpop.trf.xlu0
      %v634 = vpop.trf.xlu0
      %v635 = vpop.trf.xlu0
      %v636 = vpop.trf.xlu0
      %v637 = vpop.trf.xlu0
      %638 = vxpose.xlu0.c.b16.start [1/8] %v617, 128
      %639 = vxpose.xlu0.c.b16.cont [2/8] 0, 128
      %640 = vxpose.xlu0.c.b16.cont [3/8] 0, 128
      %641 = vxpose.xlu0.c.b16.cont [4/8] 0, 128
      %642 = vxpose.xlu0.c.b16.cont [5/8] 0, 128
      %643 = vxpose.xlu0.c.b16.cont [6/8] 0, 128
      %644 = vxpose.xlu0.c.b16.cont [7/8] 0, 128
      %645 = vxpose.xlu0.c.b16.end [8/8] 0, 128
      %v646 = vpop.trf.xlu0
      %v647 = vpop.trf.xlu0
      %v648 = vpop.trf.xlu0
      %v649 = vpop.trf.xlu0
      %v650 = vpop.trf.xlu0
      %v651 = vpop.trf.xlu0
      %v652 = vpop.trf.xlu0
      %v653 = vpop.trf.xlu0
      %vm654 = vcmask 130048
      %v656 = vsel %vm654, %v630, 0
      %v659 = vsel %vm654, %v631, 0
      %v662 = vsel %vm654, %v632, 0
      %v665 = vsel %vm654, %v633, 0
      %v668 = vsel %vm654, %v634, 0
      %v671 = vsel %vm654, %v635, 0
      %v674 = vsel %vm654, %v636, 0
      %v677 = vsel %vm654, %v637, 0
      %v680 = vsel %vm654, %v646, 0
      %v683 = vsel %vm654, %v647, 0
      %v686 = vsel %vm654, %v648, 0
      %v689 = vsel %vm654, %v649, 0
      %v692 = vsel %vm654, %v650, 0
      %v695 = vsel %vm654, %v651, 0
      %v698 = vsel %vm654, %v652, 0
      %v701 = vsel %vm654, %v653, 0
      %703 = vmatprep.subr.bf16.mxu0 %v619
      %704 = vmatpush1.bf16.msra.mxu0 %v618
      %705 = vmatprep.subr.bf16.mxu0 0
      %706 = vmatpush1.bf16.msra.mxu0 0
      %707 = vmatprep.subr.bf16.mxu0 0
      %708 = vmatpush1.bf16.msra.mxu0 0
      %709 = vmatprep.subr.bf16.mxu0 0
      %710 = vmatpush1.bf16.msra.mxu0 0
      %711 = vmatprep.subr.bf16.mxu0 0
      %712 = vmatpush1.bf16.msra.mxu0 0
      %713 = vmatprep.subr.bf16.mxu0 0
      %714 = vmatpush1.bf16.msra.mxu0 0
      %715 = vmatprep.subr.bf16.mxu0 0
      %716 = vmatpush1.bf16.msra.mxu0 0
      %717 = vmatprep.subr.bf16.mxu0 0
      %718 = vmatpush1.bf16.msra.mxu0 0
      %719 = vmatprep.subr.bf16.mxu0 0
      %720 = vmatpush1.bf16.msra.mxu0 0
      %721 = vmatprep.subr.bf16.mxu0 0
      %722 = vmatpush1.bf16.msra.mxu0 0
      %723 = vmatprep.subr.bf16.mxu0 0
      %724 = vmatpush1.bf16.msra.mxu0 0
      %725 = vmatprep.subr.bf16.mxu0 0
      %726 = vmatpush1.bf16.msra.mxu0 0
      %727 = vmatprep.subr.bf16.mxu0 0
      %728 = vmatpush1.bf16.msra.mxu0 0
      %729 = vmatprep.subr.bf16.mxu0 0
      %730 = vmatpush1.bf16.msra.mxu0 0
      %731 = vmatprep.subr.bf16.mxu0 0
      %732 = vmatpush1.bf16.msra.mxu0 0
      %733 = vmatprep.subr.bf16.mxu0 0
      %734 = vmatpush1.bf16.msra.mxu0 0
      %735 = vmatprep.mubr.bf16.mxu0 0
      %736 = vmatmul.mubr.bf16.gmra.mrb[0].mxu0 %v656
      %v737 = vpop.f32.mrb[0].mxu0
      %v738 = vadd.f32 0.0, %v737
      %v739 = vpop.f32.mrb[0].mxu0
      %v740 = vadd.f32 0.0, %v739
      %v741 = vpop.f32.mrb[0].mxu0
      %v742 = vadd.f32 0.0, %v741
      %v743 = vpop.f32.mrb[0].mxu0
      %v744 = vadd.f32 0.0, %v743
      %745 = vmatprep.mubr.bf16.mxu0 0
      %746 = vmatmul.mubr.bf16.gmra.mrb[0].mxu0 %v659
      %v747 = vpop.f32.mrb[0].mxu0
      %v748 = vadd.f32 0.0, %v747
      %v749 = vpop.f32.mrb[0].mxu0
      %v750 = vadd.f32 0.0, %v749
      %v751 = vpop.f32.mrb[0].mxu0
      %v752 = vadd.f32 0.0, %v751
      %v753 = vpop.f32.mrb[0].mxu0
      %v754 = vadd.f32 0.0, %v753
      %755 = vmatprep.mubr.bf16.mxu0 0
      %756 = vmatmul.mubr.bf16.gmra.mrb[0].mxu0 %v662
      %v757 = vpop.f32.mrb[0].mxu0
      %v758 = vadd.f32 0.0, %v757
      %v759 = vpop.f32.mrb[0].mxu0
      %v760 = vadd.f32 0.0, %v759
      %v761 = vpop.f32.mrb[0].mxu0
      %v762 = vadd.f32 0.0, %v761
      %v763 = vpop.f32.mrb[0].mxu0
      %v764 = vadd.f32 0.0, %v763
      %765 = vmatprep.mubr.bf16.mxu0 0
      %766 = vmatmul.mubr.bf16.gmra.mrb[0].mxu0 %v665
      %v767 = vpop.f32.mrb[0].mxu0
      %v768 = vadd.f32 0.0, %v767
      %v769 = vpop.f32.mrb[0].mxu0
      %v770 = vadd.f32 0.0, %v769
      %v771 = vpop.f32.mrb[0].mxu0
      %v772 = vadd.f32 0.0, %v771
      %v773 = vpop.f32.mrb[0].mxu0
      %v774 = vadd.f32 0.0, %v773
      %775 = vmatprep.mubr.bf16.mxu0 0
      %776 = vmatmul.mubr.bf16.gmra.mrb[0].mxu0 %v668
      %v777 = vpop.f32.mrb[0].mxu0
      %v778 = vadd.f32 0.0, %v777
      %v779 = vpop.f32.mrb[0].mxu0
      %v780 = vadd.f32 0.0, %v779
      %v781 = vpop.f32.mrb[0].mxu0
      %v782 = vadd.f32 0.0, %v781
      %v783 = vpop.f32.mrb[0].mxu0
      %v784 = vadd.f32 0.0, %v783
      %785 = vmatprep.mubr.bf16.mxu0 0
      %786 = vmatmul.mubr.bf16.gmra.mrb[0].mxu0 %v671
      %v787 = vpop.f32.mrb[0].mxu0
      %v788 = vadd.f32 0.0, %v787
      %v789 = vpop.f32.mrb[0].mxu0
      %v790 = vadd.f32 0.0, %v789
      %v791 = vpop.f32.mrb[0].mxu0
      %v792 = vadd.f32 0.0, %v791
      %v793 = vpop.f32.mrb[0].mxu0
      %v794 = vadd.f32 0.0, %v793
      %795 = vmatprep.mubr.bf16.mxu0 0
      %796 = vmatmul.mubr.bf16.gmra.mrb[0].mxu0 %v674
      %v797 = vpop.f32.mrb[0].mxu0
      %v798 = vadd.f32 0.0, %v797
      %v799 = vpop.f32.mrb[0].mxu0
      %v800 = vadd.f32 0.0, %v799
      %v801 = vpop.f32.mrb[0].mxu0
      %v802 = vadd.f32 0.0, %v801
      %v803 = vpop.f32.mrb[0].mxu0
      %v804 = vadd.f32 0.0, %v803
      %805 = vmatprep.mubr.bf16.mxu0 0
      %806 = vmatmul.mubr.bf16.gmra.mrb[0].mxu0 %v677
      %v807 = vpop.f32.mrb[0].mxu0
      %v808 = vadd.f32 0.0, %v807
      %v809 = vpop.f32.mrb[0].mxu0
      %v810 = vadd.f32 0.0, %v809
      %v811 = vpop.f32.mrb[0].mxu0
      %v812 = vadd.f32 0.0, %v811
      %v813 = vpop.f32.mrb[0].mxu0
      %v814 = vadd.f32 0.0, %v813
      %815 = vmatprep.mubr.bf16.mxu0 0
      %816 = vmatmul.mubr.bf16.gmra.mrb[0].mxu0 %v680
      %v817 = vpop.f32.mrb[0].mxu0
      %v818 = vadd.f32 0.0, %v817
      %v819 = vpop.f32.mrb[0].mxu0
      %v820 = vadd.f32 0.0, %v819
      %v821 = vpop.f32.mrb[0].mxu0
      %v822 = vadd.f32 0.0, %v821
      %v823 = vpop.f32.mrb[0].mxu0
      %v824 = vadd.f32 0.0, %v823
      %825 = vmatprep.mubr.bf16.mxu0 0
      %826 = vmatmul.mubr.bf16.gmra.mrb[0].mxu0 %v683
      %v827 = vpop.f32.mrb[0].mxu0
      %v828 = vadd.f32 0.0, %v827
      %v829 = vpop.f32.mrb[0].mxu0
      %v830 = vadd.f32 0.0, %v829
      %v831 = vpop.f32.mrb[0].mxu0
      %v832 = vadd.f32 0.0, %v831
      %v833 = vpop.f32.mrb[0].mxu0
      %v834 = vadd.f32 0.0, %v833
      %835 = vmatprep.mubr.bf16.mxu0 0
      %836 = vmatmul.mubr.bf16.gmra.mrb[0].mxu0 %v686
      %v837 = vpop.f32.mrb[0].mxu0
      %v838 = vadd.f32 0.0, %v837
      %v839 = vpop.f32.mrb[0].mxu0
      %v840 = vadd.f32 0.0, %v839
      %v841 = vpop.f32.mrb[0].mxu0
      %v842 = vadd.f32 0.0, %v841
      %v843 = vpop.f32.mrb[0].mxu0
      %v844 = vadd.f32 0.0, %v843
      %845 = vmatprep.mubr.bf16.mxu0 0
      %846 = vmatmul.mubr.bf16.gmra.mrb[0].mxu0 %v689
      %v847 = vpop.f32.mrb[0].mxu0
      %v848 = vadd.f32 0.0, %v847
      %v849 = vpop.f32.mrb[0].mxu0
      %v850 = vadd.f32 0.0, %v849
      %v851 = vpop.f32.mrb[0].mxu0
      %v852 = vadd.f32 0.0, %v851
      %v853 = vpop.f32.mrb[0].mxu0
      %v854 = vadd.f32 0.0, %v853
      %855 = vmatprep.mubr.bf16.mxu0 0
      %856 = vmatmul.mubr.bf16.gmra.mrb[0].mxu0 %v692
      %v857 = vpop.f32.mrb[0].mxu0
      %v858 = vadd.f32 0.0, %v857
      %v859 = vpop.f32.mrb[0].mxu0
      %v860 = vadd.f32 0.0, %v859
      %v861 = vpop.f32.mrb[0].mxu0
      %v862 = vadd.f32 0.0, %v861
      %v863 = vpop.f32.mrb[0].mxu0
      %v864 = vadd.f32 0.0, %v863
      %865 = vmatprep.mubr.bf16.mxu0 0
      %866 = vmatmul.mubr.bf16.gmra.mrb[0].mxu0 %v695
      %v867 = vpop.f32.mrb[0].mxu0
      %v868 = vadd.f32 0.0, %v867
      %v869 = vpop.f32.mrb[0].mxu0
      %v870 = vadd.f32 0.0, %v869
      %v871 = vpop.f32.mrb[0].mxu0
      %v872 = vadd.f32 0.0, %v871
      %v873 = vpop.f32.mrb[0].mxu0
      %v874 = vadd.f32 0.0, %v873
      %875 = vmatprep.mubr.bf16.mxu0 0
      %876 = vmatmul.mubr.bf16.gmra.mrb[0].mxu0 %v698
      %v877 = vpop.f32.mrb[0].mxu0
      %v878 = vadd.f32 0.0, %v877
      %v879 = vpop.f32.mrb[0].mxu0
      %v880 = vadd.f32 0.0, %v879
      %v881 = vpop.f32.mrb[0].mxu0
      %v882 = vadd.f32 0.0, %v881
      %v883 = vpop.f32.mrb[0].mxu0
      %v884 = vadd.f32 0.0, %v883
      %885 = vmatprep.mubr.bf16.mxu0 0
      %886 = vmatmul.mubr.bf16.gmra.mrb[0].mxu0 %v701
      %v887 = vpop.f32.mrb[0].mxu0
      %v888 = vadd.f32 0.0, %v887
      %v889 = vpop.f32.mrb[0].mxu0
      %v890 = vadd.f32 0.0, %v889
      %v891 = vpop.f32.mrb[0].mxu0
      %v892 = vadd.f32 0.0, %v891
      %v893 = vpop.f32.mrb[0].mxu0
      %v894 = vadd.f32 0.0, %v893
      %895 = vdwg.mxu0
      %896 = vmatprep.subr.bf16.mxu0 %v621
      %897 = vmatpush1.bf16.msra.mxu0 %v620
      %898 = vmatprep.subr.bf16.mxu0 0
      %899 = vmatpush1.bf16.msra.mxu0 0
      %900 = vmatprep.subr.bf16.mxu0 0
      %901 = vmatpush1.bf16.msra.mxu0 0
      %902 = vmatprep.subr.bf16.mxu0 0
      %903 = vmatpush1.bf16.msra.mxu0 0
      %904 = vmatprep.subr.bf16.mxu0 0
      %905 = vmatpush1.bf16.msra.mxu0 0
      %906 = vmatprep.subr.bf16.mxu0 0
      %907 = vmatpush1.bf16.msra.mxu0 0
      %908 = vmatprep.subr.bf16.mxu0 0
      %909 = vmatpush1.bf16.msra.mxu0 0
      %910 = vmatprep.subr.bf16.mxu0 0
      %911 = vmatpush1.bf16.msra.mxu0 0
      %912 = vmatprep.subr.bf16.mxu0 0
      %913 = vmatpush1.bf16.msra.mxu0 0
      %914 = vmatprep.subr.bf16.mxu0 0
      %915 = vmatpush1.bf16.msra.mxu0 0
      %916 = vmatprep.subr.bf16.mxu0 0
      %917 = vmatpush1.bf16.msra.mxu0 0
      %918 = vmatprep.subr.bf16.mxu0 0
      %919 = vmatpush1.bf16.msra.mxu0 0
      %920 = vmatprep.subr.bf16.mxu0 0
      %921 = vmatpush1.bf16.msra.mxu0 0
      %922 = vmatprep.subr.bf16.mxu0 0
      %923 = vmatpush1.bf16.msra.mxu0 0
      %924 = vmatprep.subr.bf16.mxu0 0
      %925 = vmatpush1.bf16.msra.mxu0 0
      %926 = vmatprep.subr.bf16.mxu0 0
      %927 = vmatpush1.bf16.msra.mxu0 0
      %928 = vmatprep.mubr.bf16.mxu0 0
      %929 = vmatmul.mubr.bf16.gmra.mrb[0].mxu0 %v656
      %v930 = vpop.f32.mrb[0].mxu0
      %v931 = vadd.f32 0.0, %v930
      %v932 = vpop.f32.mrb[0].mxu0
      %v933 = vadd.f32 0.0, %v932
      %v934 = vpop.f32.mrb[0].mxu0
      %v935 = vadd.f32 0.0, %v934
      %v936 = vpop.f32.mrb[0].mxu0
      %v937 = vadd.f32 0.0, %v936
      %938 = vmatprep.mubr.bf16.mxu0 0
      %939 = vmatmul.mubr.bf16.gmra.mrb[0].mxu0 %v659
      %v940 = vpop.f32.mrb[0].mxu0
      %v941 = vadd.f32 0.0, %v940
      %v942 = vpop.f32.mrb[0].mxu0
      %v943 = vadd.f32 0.0, %v942
      %v944 = vpop.f32.mrb[0].mxu0
      %v945 = vadd.f32 0.0, %v944
      %v946 = vpop.f32.mrb[0].mxu0
      %v947 = vadd.f32 0.0, %v946
      %948 = vmatprep.mubr.bf16.mxu0 0
      %949 = vmatmul.mubr.bf16.gmra.mrb[0].mxu0 %v662
      %v950 = vpop.f32.mrb[0].mxu0
      %v951 = vadd.f32 0.0, %v950
      %v952 = vpop.f32.mrb[0].mxu0
      %v953 = vadd.f32 0.0, %v952
      %v954 = vpop.f32.mrb[0].mxu0
      %v955 = vadd.f32 0.0, %v954
      %v956 = vpop.f32.mrb[0].mxu0
      %v957 = vadd.f32 0.0, %v956
      %958 = vmatprep.mubr.bf16.mxu0 0
      %959 = vmatmul.mubr.bf16.gmra.mrb[0].mxu0 %v665
      %v960 = vpop.f32.mrb[0].mxu0
      %v961 = vadd.f32 0.0, %v960
      %v962 = vpop.f32.mrb[0].mxu0
      %v963 = vadd.f32 0.0, %v962
      %v964 = vpop.f32.mrb[0].mxu0
      %v965 = vadd.f32 0.0, %v964
      %v966 = vpop.f32.mrb[0].mxu0
      %v967 = vadd.f32 0.0, %v966
      %968 = vmatprep.mubr.bf16.mxu0 0
      %969 = vmatmul.mubr.bf16.gmra.mrb[0].mxu0 %v668
      %v970 = vpop.f32.mrb[0].mxu0
      %v971 = vadd.f32 0.0, %v970
      %v972 = vpop.f32.mrb[0].mxu0
      %v973 = vadd.f32 0.0, %v972
      %v974 = vpop.f32.mrb[0].mxu0
      %v975 = vadd.f32 0.0, %v974
      %v976 = vpop.f32.mrb[0].mxu0
      %v977 = vadd.f32 0.0, %v976
      %978 = vmatprep.mubr.bf16.mxu0 0
      %979 = vmatmul.mubr.bf16.gmra.mrb[0].mxu0 %v671
      %v980 = vpop.f32.mrb[0].mxu0
      %v981 = vadd.f32 0.0, %v980
      %v982 = vpop.f32.mrb[0].mxu0
      %v983 = vadd.f32 0.0, %v982
      %v984 = vpop.f32.mrb[0].mxu0
      %v985 = vadd.f32 0.0, %v984
      %v986 = vpop.f32.mrb[0].mxu0
      %v987 = vadd.f32 0.0, %v986
      %988 = vmatprep.mubr.bf16.mxu0 0
      %989 = vmatmul.mubr.bf16.gmra.mrb[0].mxu0 %v674
      %v990 = vpop.f32.mrb[0].mxu0
      %v991 = vadd.f32 0.0, %v990
      %v992 = vpop.f32.mrb[0].mxu0
      %v993 = vadd.f32 0.0, %v992
      %v994 = vpop.f32.mrb[0].mxu0
      %v995 = vadd.f32 0.0, %v994
      %v996 = vpop.f32.mrb[0].mxu0
      %v997 = vadd.f32 0.0, %v996
      %998 = vmatprep.mubr.bf16.mxu0 0
      %999 = vmatmul.mubr.bf16.gmra.mrb[0].mxu0 %v677
      %v1000 = vpop.f32.mrb[0].mxu0
      %v1001 = vadd.f32 0.0, %v1000
      %v1002 = vpop.f32.mrb[0].mxu0
      %v1003 = vadd.f32 0.0, %v1002
      %v1004 = vpop.f32.mrb[0].mxu0
      %v1005 = vadd.f32 0.0, %v1004
      %v1006 = vpop.f32.mrb[0].mxu0
      %v1007 = vadd.f32 0.0, %v1006
      %1008 = vmatprep.mubr.bf16.mxu0 0
      %1009 = vmatmul.mubr.bf16.gmra.mrb[0].mxu0 %v680
      %v1010 = vpop.f32.mrb[0].mxu0
      %v1011 = vadd.f32 0.0, %v1010
      %v1012 = vpop.f32.mrb[0].mxu0
      %v1013 = vadd.f32 0.0, %v1012
      %v1014 = vpop.f32.mrb[0].mxu0
      %v1015 = vadd.f32 0.0, %v1014
      %v1016 = vpop.f32.mrb[0].mxu0
      %v1017 = vadd.f32 0.0, %v1016
      %1018 = vmatprep.mubr.bf16.mxu0 0
      %1019 = vmatmul.mubr.bf16.gmra.mrb[0].mxu0 %v683
      %v1020 = vpop.f32.mrb[0].mxu0
      %v1021 = vadd.f32 0.0, %v1020
      %v1022 = vpop.f32.mrb[0].mxu0
      %v1023 = vadd.f32 0.0, %v1022
      %v1024 = vpop.f32.mrb[0].mxu0
      %v1025 = vadd.f32 0.0, %v1024
      %v1026 = vpop.f32.mrb[0].mxu0
      %v1027 = vadd.f32 0.0, %v1026
      %1028 = vmatprep.mubr.bf16.mxu0 0
      %1029 = vmatmul.mubr.bf16.gmra.mrb[0].mxu0 %v686
      %v1030 = vpop.f32.mrb[0].mxu0
      %v1031 = vadd.f32 0.0, %v1030
      %v1032 = vpop.f32.mrb[0].mxu0
      %v1033 = vadd.f32 0.0, %v1032
      %v1034 = vpop.f32.mrb[0].mxu0
      %v1035 = vadd.f32 0.0, %v1034
      %v1036 = vpop.f32.mrb[0].mxu0
      %v1037 = vadd.f32 0.0, %v1036
      %1038 = vmatprep.mubr.bf16.mxu0 0
      %1039 = vmatmul.mubr.bf16.gmra.mrb[0].mxu0 %v689
      %v1040 = vpop.f32.mrb[0].mxu0
      %v1041 = vadd.f32 0.0, %v1040
      %v1042 = vpop.f32.mrb[0].mxu0
      %v1043 = vadd.f32 0.0, %v1042
      %v1044 = vpop.f32.mrb[0].mxu0
      %v1045 = vadd.f32 0.0, %v1044
      %v1046 = vpop.f32.mrb[0].mxu0
      %v1047 = vadd.f32 0.0, %v1046
      %1048 = vmatprep.mubr.bf16.mxu0 0
      %1049 = vmatmul.mubr.bf16.gmra.mrb[0].mxu0 %v692
      %v1050 = vpop.f32.mrb[0].mxu0
      %v1051 = vadd.f32 0.0, %v1050
      %v1052 = vpop.f32.mrb[0].mxu0
      %v1053 = vadd.f32 0.0, %v1052
      %v1054 = vpop.f32.mrb[0].mxu0
      %v1055 = vadd.f32 0.0, %v1054
      %v1056 = vpop.f32.mrb[0].mxu0
      %v1057 = vadd.f32 0.0, %v1056
      %1058 = vmatprep.mubr.bf16.mxu0 0
      %1059 = vmatmul.mubr.bf16.gmra.mrb[0].mxu0 %v695
      %v1060 = vpop.f32.mrb[0].mxu0
      %v1061 = vadd.f32 0.0, %v1060
      %v1062 = vpop.f32.mrb[0].mxu0
      %v1063 = vadd.f32 0.0, %v1062
      %v1064 = vpop.f32.mrb[0].mxu0
      %v1065 = vadd.f32 0.0, %v1064
      %v1066 = vpop.f32.mrb[0].mxu0
      %v1067 = vadd.f32 0.0, %v1066
      %1068 = vmatprep.mubr.bf16.mxu0 0
      %1069 = vmatmul.mubr.bf16.gmra.mrb[0].mxu0 %v698
      %v1070 = vpop.f32.mrb[0].mxu0
      %v1071 = vadd.f32 0.0, %v1070
      %v1072 = vpop.f32.mrb[0].mxu0
      %v1073 = vadd.f32 0.0, %v1072
      %v1074 = vpop.f32.mrb[0].mxu0
      %v1075 = vadd.f32 0.0, %v1074
      %v1076 = vpop.f32.mrb[0].mxu0
      %v1077 = vadd.f32 0.0, %v1076
      %1078 = vmatprep.mubr.bf16.mxu0 0
      %1079 = vmatmul.mubr.bf16.gmra.mrb[0].mxu0 %v701
      %v1080 = vpop.f32.mrb[0].mxu0
      %v1081 = vadd.f32 0.0, %v1080
      %v1082 = vpop.f32.mrb[0].mxu0
      %v1083 = vadd.f32 0.0, %v1082
      %v1084 = vpop.f32.mrb[0].mxu0
      %v1085 = vadd.f32 0.0, %v1084
      %v1086 = vpop.f32.mrb[0].mxu0
      %v1087 = vadd.f32 0.0, %v1086
      %1088 = vdwg.mxu0
      %v1089 = vmax.f32 %v738, %v740
      %v1090 = vmax.f32 %v1089, %v931
      %v1091 = vmax.f32 %v1090, %v933
      %1092 = vmax.xlane.f32.xlu0 %v1091
      %v1093 = vpop.xlane.xlu0 %1092
      %v1094 = vmax.f32 %v742, %v744
      %v1095 = vmax.f32 %v1094, %v935
      %v1096 = vmax.f32 %v1095, %v937
      %1097 = vmax.xlane.f32.xlu0 %v1096
      %v1098 = vpop.xlane.xlu0 %1097
      %v1099 = vmax.f32 %v748, %v750
      %v1100 = vmax.f32 %v1099, %v941
      %v1101 = vmax.f32 %v1100, %v943
      %1102 = vmax.xlane.f32.xlu0 %v1101
      %v1103 = vpop.xlane.xlu0 %1102
      %v1104 = vmax.f32 %v752, %v754
      %v1105 = vmax.f32 %v1104, %v945
      %v1106 = vmax.f32 %v1105, %v947
      %1107 = vmax.xlane.f32.xlu0 %v1106
      %v1108 = vpop.xlane.xlu0 %1107
      %v1109 = vmax.f32 %v758, %v760
      %v1110 = vmax.f32 %v1109, %v951
      %v1111 = vmax.f32 %v1110, %v953
      %1112 = vmax.xlane.f32.xlu0 %v1111
      %v1113 = vpop.xlane.xlu0 %1112
      %v1114 = vmax.f32 %v762, %v764
      %v1115 = vmax.f32 %v1114, %v955
      %v1116 = vmax.f32 %v1115, %v957
      %1117 = vmax.xlane.f32.xlu0 %v1116
      %v1118 = vpop.xlane.xlu0 %1117
      %v1119 = vmax.f32 %v768, %v770
      %v1120 = vmax.f32 %v1119, %v961
      %v1121 = vmax.f32 %v1120, %v963
      %1122 = vmax.xlane.f32.xlu0 %v1121
      %v1123 = vpop.xlane.xlu0 %1122
      %v1124 = vmax.f32 %v772, %v774
      %v1125 = vmax.f32 %v1124, %v965
      %v1126 = vmax.f32 %v1125, %v967
      %1127 = vmax.xlane.f32.xlu0 %v1126
      %v1128 = vpop.xlane.xlu0 %1127
      %v1129 = vmax.f32 %v778, %v780
      %v1130 = vmax.f32 %v1129, %v971
      %v1131 = vmax.f32 %v1130, %v973
      %1132 = vmax.xlane.f32.xlu0 %v1131
      %v1133 = vpop.xlane.xlu0 %1132
      %v1134 = vmax.f32 %v782, %v784
      %v1135 = vmax.f32 %v1134, %v975
      %v1136 = vmax.f32 %v1135, %v977
      %1137 = vmax.xlane.f32.xlu0 %v1136
      %v1138 = vpop.xlane.xlu0 %1137
      %v1139 = vmax.f32 %v788, %v790
      %v1140 = vmax.f32 %v1139, %v981
      %v1141 = vmax.f32 %v1140, %v983
      %1142 = vmax.xlane.f32.xlu0 %v1141
      %v1143 = vpop.xlane.xlu0 %1142
      %v1144 = vmax.f32 %v792, %v794
      %v1145 = vmax.f32 %v1144, %v985
      %v1146 = vmax.f32 %v1145, %v987
      %1147 = vmax.xlane.f32.xlu0 %v1146
      %v1148 = vpop.xlane.xlu0 %1147
      %v1149 = vmax.f32 %v798, %v800
      %v1150 = vmax.f32 %v1149, %v991
      %v1151 = vmax.f32 %v1150, %v993
      %1152 = vmax.xlane.f32.xlu0 %v1151
      %v1153 = vpop.xlane.xlu0 %1152
      %v1154 = vmax.f32 %v802, %v804
      %v1155 = vmax.f32 %v1154, %v995
      %v1156 = vmax.f32 %v1155, %v997
      %1157 = vmax.xlane.f32.xlu0 %v1156
      %v1158 = vpop.xlane.xlu0 %1157
      %v1159 = vmax.f32 %v808, %v810
      %v1160 = vmax.f32 %v1159, %v1001
      %v1161 = vmax.f32 %v1160, %v1003
      %1162 = vmax.xlane.f32.xlu0 %v1161
      %v1163 = vpop.xlane.xlu0 %1162
      %v1164 = vmax.f32 %v812, %v814
      %v1165 = vmax.f32 %v1164, %v1005
      %v1166 = vmax.f32 %v1165, %v1007
      %1167 = vmax.xlane.f32.xlu0 %v1166
      %v1168 = vpop.xlane.xlu0 %1167
      %v1169 = vmax.f32 %v818, %v820
      %v1170 = vmax.f32 %v1169, %v1011
      %v1171 = vmax.f32 %v1170, %v1013
      %1172 = vmax.xlane.f32.xlu0 %v1171
      %v1173 = vpop.xlane.xlu0 %1172
      %v1174 = vmax.f32 %v822, %v824
      %v1175 = vmax.f32 %v1174, %v1015
      %v1176 = vmax.f32 %v1175, %v1017
      %1177 = vmax.xlane.f32.xlu0 %v1176
      %v1178 = vpop.xlane.xlu0 %1177
      %v1179 = vmax.f32 %v828, %v830
      %v1180 = vmax.f32 %v1179, %v1021
      %v1181 = vmax.f32 %v1180, %v1023
      %1182 = vmax.xlane.f32.xlu0 %v1181
      %v1183 = vpop.xlane.xlu0 %1182
      %v1184 = vmax.f32 %v832, %v834
      %v1185 = vmax.f32 %v1184, %v1025
      %v1186 = vmax.f32 %v1185, %v1027
      %1187 = vmax.xlane.f32.xlu0 %v1186
      %v1188 = vpop.xlane.xlu0 %1187
      %v1189 = vmax.f32 %v838, %v840
      %v1190 = vmax.f32 %v1189, %v1031
      %v1191 = vmax.f32 %v1190, %v1033
      %1192 = vmax.xlane.f32.xlu0 %v1191
      %v1193 = vpop.xlane.xlu0 %1192
      %v1194 = vmax.f32 %v842, %v844
      %v1195 = vmax.f32 %v1194, %v1035
      %v1196 = vmax.f32 %v1195, %v1037
      %1197 = vmax.xlane.f32.xlu0 %v1196
      %v1198 = vpop.xlane.xlu0 %1197
      %v1199 = vmax.f32 %v848, %v850
      %v1200 = vmax.f32 %v1199, %v1041
      %v1201 = vmax.f32 %v1200, %v1043
      %1202 = vmax.xlane.f32.xlu0 %v1201
      %v1203 = vpop.xlane.xlu0 %1202
      %v1204 = vmax.f32 %v852, %v854
      %v1205 = vmax.f32 %v1204, %v1045
      %v1206 = vmax.f32 %v1205, %v1047
      %1207 = vmax.xlane.f32.xlu0 %v1206
      %v1208 = vpop.xlane.xlu0 %1207
      %v1209 = vmax.f32 %v858, %v860
      %v1210 = vmax.f32 %v1209, %v1051
      %v1211 = vmax.f32 %v1210, %v1053
      %1212 = vmax.xlane.f32.xlu0 %v1211
      %v1213 = vpop.xlane.xlu0 %1212
      %v1214 = vmax.f32 %v862, %v864
      %v1215 = vmax.f32 %v1214, %v1055
      %v1216 = vmax.f32 %v1215, %v1057
      %1217 = vmax.xlane.f32.xlu0 %v1216
      %v1218 = vpop.xlane.xlu0 %1217
      %v1219 = vmax.f32 %v868, %v870
      %v1220 = vmax.f32 %v1219, %v1061
      %v1221 = vmax.f32 %v1220, %v1063
      %1222 = vmax.xlane.f32.xlu0 %v1221
      %v1223 = vpop.xlane.xlu0 %1222
      %v1224 = vmax.f32 %v872, %v874
      %v1225 = vmax.f32 %v1224, %v1065
      %v1226 = vmax.f32 %v1225, %v1067
      %1227 = vmax.xlane.f32.xlu0 %v1226
      %v1228 = vpop.xlane.xlu0 %1227
      %v1229 = vmax.f32 %v878, %v880
      %v1230 = vmax.f32 %v1229, %v1071
      %v1231 = vmax.f32 %v1230, %v1073
      %1232 = vmax.xlane.f32.xlu0 %v1231
      %v1233 = vpop.xlane.xlu0 %1232
      %v1234 = vmax.f32 %v882, %v884
      %v1235 = vmax.f32 %v1234, %v1075
      %v1236 = vmax.f32 %v1235, %v1077
      %1237 = vmax.xlane.f32.xlu0 %v1236
      %v1238 = vpop.xlane.xlu0 %1237
      %v1239 = vmax.f32 %v888, %v890
      %v1240 = vmax.f32 %v1239, %v1081
      %v1241 = vmax.f32 %v1240, %v1083
      %1242 = vmax.xlane.f32.xlu0 %v1241
      %v1243 = vpop.xlane.xlu0 %1242
      %v1244 = vmax.f32 %v892, %v894
      %v1245 = vmax.f32 %v1244, %v1085
      %v1246 = vmax.f32 %v1245, %v1087
      %1247 = vmax.xlane.f32.xlu0 %v1246
      %v1248 = vpop.xlane.xlu0 %1247
      %v1249 = vsub.f32 %v738, %v1093
      %v1250 = vsub.f32 %v740, %v1093
      %v1251 = vsub.f32 %v931, %v1093
      %v1252 = vsub.f32 %v933, %v1093
      %v1253 = vsub.f32 %v742, %v1098
      %v1254 = vsub.f32 %v744, %v1098
      %v1255 = vsub.f32 %v935, %v1098
      %v1256 = vsub.f32 %v937, %v1098
      %v1257 = vsub.f32 %v748, %v1103
      %v1258 = vsub.f32 %v750, %v1103
      %v1259 = vsub.f32 %v941, %v1103
      %v1260 = vsub.f32 %v943, %v1103
      %v1261 = vsub.f32 %v752, %v1108
      %v1262 = vsub.f32 %v754, %v1108
      %v1263 = vsub.f32 %v945, %v1108
      %v1264 = vsub.f32 %v947, %v1108
      %v1265 = vsub.f32 %v758, %v1113
      %v1266 = vsub.f32 %v760, %v1113
      %v1267 = vsub.f32 %v951, %v1113
      %v1268 = vsub.f32 %v953, %v1113
      %v1269 = vsub.f32 %v762, %v1118
      %v1270 = vsub.f32 %v764, %v1118
      %v1271 = vsub.f32 %v955, %v1118
      %v1272 = vsub.f32 %v957, %v1118
      %v1273 = vsub.f32 %v768, %v1123
      %v1274 = vsub.f32 %v770, %v1123
      %v1275 = vsub.f32 %v961, %v1123
      %v1276 = vsub.f32 %v963, %v1123
      %v1277 = vsub.f32 %v772, %v1128
      %v1278 = vsub.f32 %v774, %v1128
      %v1279 = vsub.f32 %v965, %v1128
      %v1280 = vsub.f32 %v967, %v1128
      %v1281 = vsub.f32 %v778, %v1133
      %v1282 = vsub.f32 %v780, %v1133
      %v1283 = vsub.f32 %v971, %v1133
      %v1284 = vsub.f32 %v973, %v1133
      %v1285 = vsub.f32 %v782, %v1138
      %v1286 = vsub.f32 %v784, %v1138
      %v1287 = vsub.f32 %v975, %v1138
      %v1288 = vsub.f32 %v977, %v1138
      %v1289 = vsub.f32 %v788, %v1143
      %v1290 = vsub.f32 %v790, %v1143
      %v1291 = vsub.f32 %v981, %v1143
      %v1292 = vsub.f32 %v983, %v1143
      %v1293 = vsub.f32 %v792, %v1148
      %v1294 = vsub.f32 %v794, %v1148
      %v1295 = vsub.f32 %v985, %v1148
      %v1296 = vsub.f32 %v987, %v1148
      %v1297 = vsub.f32 %v798, %v1153
      %v1298 = vsub.f32 %v800, %v1153
      %v1299 = vsub.f32 %v991, %v1153
      %v1300 = vsub.f32 %v993, %v1153
      %v1301 = vsub.f32 %v802, %v1158
      %v1302 = vsub.f32 %v804, %v1158
      %v1303 = vsub.f32 %v995, %v1158
      %v1304 = vsub.f32 %v997, %v1158
      %v1305 = vsub.f32 %v808, %v1163
      %v1306 = vsub.f32 %v810, %v1163
      %v1307 = vsub.f32 %v1001, %v1163
      %v1308 = vsub.f32 %v1003, %v1163
      %v1309 = vsub.f32 %v812, %v1168
      %v1310 = vsub.f32 %v814, %v1168
      %v1311 = vsub.f32 %v1005, %v1168
      %v1312 = vsub.f32 %v1007, %v1168
      %v1313 = vsub.f32 %v818, %v1173
      %v1314 = vsub.f32 %v820, %v1173
      %v1315 = vsub.f32 %v1011, %v1173
      %v1316 = vsub.f32 %v1013, %v1173
      %v1317 = vsub.f32 %v822, %v1178
      %v1318 = vsub.f32 %v824, %v1178
      %v1319 = vsub.f32 %v1015, %v1178
      %v1320 = vsub.f32 %v1017, %v1178
      %v1321 = vsub.f32 %v828, %v1183
      %v1322 = vsub.f32 %v830, %v1183
      %v1323 = vsub.f32 %v1021, %v1183
      %v1324 = vsub.f32 %v1023, %v1183
      %v1325 = vsub.f32 %v832, %v1188
      %v1326 = vsub.f32 %v834, %v1188
      %v1327 = vsub.f32 %v1025, %v1188
      %v1328 = vsub.f32 %v1027, %v1188
      %v1329 = vsub.f32 %v838, %v1193
      %v1330 = vsub.f32 %v840, %v1193
      %v1331 = vsub.f32 %v1031, %v1193
      %v1332 = vsub.f32 %v1033, %v1193
      %v1333 = vsub.f32 %v842, %v1198
      %v1334 = vsub.f32 %v844, %v1198
      %v1335 = vsub.f32 %v1035, %v1198
      %v1336 = vsub.f32 %v1037, %v1198
      %v1337 = vsub.f32 %v848, %v1203
      %v1338 = vsub.f32 %v850, %v1203
      %v1339 = vsub.f32 %v1041, %v1203
      %v1340 = vsub.f32 %v1043, %v1203
      %v1341 = vsub.f32 %v852, %v1208
      %v1342 = vsub.f32 %v854, %v1208
      %v1343 = vsub.f32 %v1045, %v1208
      %v1344 = vsub.f32 %v1047, %v1208
      %v1345 = vsub.f32 %v858, %v1213
      %v1346 = vsub.f32 %v860, %v1213
      %v1347 = vsub.f32 %v1051, %v1213
      %v1348 = vsub.f32 %v1053, %v1213
      %v1349 = vsub.f32 %v862, %v1218
      %v1350 = vsub.f32 %v864, %v1218
      %v1351 = vsub.f32 %v1055, %v1218
      %v1352 = vsub.f32 %v1057, %v1218
      %v1353 = vsub.f32 %v868, %v1223
      %v1354 = vsub.f32 %v870, %v1223
      %v1355 = vsub.f32 %v1061, %v1223
      %v1356 = vsub.f32 %v1063, %v1223
      %v1357 = vsub.f32 %v872, %v1228
      %v1358 = vsub.f32 %v874, %v1228
      %v1359 = vsub.f32 %v1065, %v1228
      %v1360 = vsub.f32 %v1067, %v1228
      %v1361 = vsub.f32 %v878, %v1233
      %v1362 = vsub.f32 %v880, %v1233
      %v1363 = vsub.f32 %v1071, %v1233
      %v1364 = vsub.f32 %v1073, %v1233
      %v1365 = vsub.f32 %v882, %v1238
      %v1366 = vsub.f32 %v884, %v1238
      %v1367 = vsub.f32 %v1075, %v1238
      %v1368 = vsub.f32 %v1077, %v1238
      %v1369 = vsub.f32 %v888, %v1243
      %v1370 = vsub.f32 %v890, %v1243
      %v1371 = vsub.f32 %v1081, %v1243
      %v1372 = vsub.f32 %v1083, %v1243
      %v1373 = vsub.f32 %v892, %v1248
      %v1374 = vsub.f32 %v894, %v1248
      %v1375 = vsub.f32 %v1085, %v1248
      %v1376 = vsub.f32 %v1087, %v1248
      %v1377 = vpack.c.bf16 %v1253, %v1249
      %v1378 = vpack.c.bf16 %v1254, %v1250
      %v1379 = vpack.c.bf16 %v1255, %v1251
      %v1380 = vpack.c.bf16 %v1256, %v1252
      %v1381 = vpack.c.bf16 %v1261, %v1257
      %v1382 = vpack.c.bf16 %v1262, %v1258
      %v1383 = vpack.c.bf16 %v1263, %v1259
      %v1384 = vpack.c.bf16 %v1264, %v1260
      %v1385 = vpack.c.bf16 %v1269, %v1265
      %v1386 = vpack.c.bf16 %v1270, %v1266
      %v1387 = vpack.c.bf16 %v1271, %v1267
      %v1388 = vpack.c.bf16 %v1272, %v1268
      %v1389 = vpack.c.bf16 %v1277, %v1273
      %v1390 = vpack.c.bf16 %v1278, %v1274
      %v1391 = vpack.c.bf16 %v1279, %v1275
      %v1392 = vpack.c.bf16 %v1280, %v1276
      %v1393 = vpack.c.bf16 %v1285, %v1281
      %v1394 = vpack.c.bf16 %v1286, %v1282
      %v1395 = vpack.c.bf16 %v1287, %v1283
      %v1396 = vpack.c.bf16 %v1288, %v1284
      %v1397 = vpack.c.bf16 %v1293, %v1289
      %v1398 = vpack.c.bf16 %v1294, %v1290
      %v1399 = vpack.c.bf16 %v1295, %v1291
      %v1400 = vpack.c.bf16 %v1296, %v1292
      %v1401 = vpack.c.bf16 %v1301, %v1297
      %v1402 = vpack.c.bf16 %v1302, %v1298
      %v1403 = vpack.c.bf16 %v1303, %v1299
      %v1404 = vpack.c.bf16 %v1304, %v1300
      %v1405 = vpack.c.bf16 %v1309, %v1305
      %v1406 = vpack.c.bf16 %v1310, %v1306
      %v1407 = vpack.c.bf16 %v1311, %v1307
      %v1408 = vpack.c.bf16 %v1312, %v1308
      %v1409 = vpack.c.bf16 %v1317, %v1313
      %v1410 = vpack.c.bf16 %v1318, %v1314
      %v1411 = vpack.c.bf16 %v1319, %v1315
      %v1412 = vpack.c.bf16 %v1320, %v1316
      %v1413 = vpack.c.bf16 %v1325, %v1321
      %v1414 = vpack.c.bf16 %v1326, %v1322
      %v1415 = vpack.c.bf16 %v1327, %v1323
      %v1416 = vpack.c.bf16 %v1328, %v1324
      %v1417 = vpack.c.bf16 %v1333, %v1329
      %v1418 = vpack.c.bf16 %v1334, %v1330
      %v1419 = vpack.c.bf16 %v1335, %v1331
      %v1420 = vpack.c.bf16 %v1336, %v1332
      %v1421 = vpack.c.bf16 %v1341, %v1337
      %v1422 = vpack.c.bf16 %v1342, %v1338
      %v1423 = vpack.c.bf16 %v1343, %v1339
      %v1424 = vpack.c.bf16 %v1344, %v1340
      %v1425 = vpack.c.bf16 %v1349, %v1345
      %v1426 = vpack.c.bf16 %v1350, %v1346
      %v1427 = vpack.c.bf16 %v1351, %v1347
      %v1428 = vpack.c.bf16 %v1352, %v1348
      %v1429 = vpack.c.bf16 %v1357, %v1353
      %v1430 = vpack.c.bf16 %v1358, %v1354
      %v1431 = vpack.c.bf16 %v1359, %v1355
      %v1432 = vpack.c.bf16 %v1360, %v1356
      %v1433 = vpack.c.bf16 %v1365, %v1361
      %v1434 = vpack.c.bf16 %v1366, %v1362
      %v1435 = vpack.c.bf16 %v1367, %v1363
      %v1436 = vpack.c.bf16 %v1368, %v1364
      %v1437 = vpack.c.bf16 %v1373, %v1369
      %v1438 = vpack.c.bf16 %v1374, %v1370
      %v1439 = vpack.c.bf16 %v1375, %v1371
      %v1440 = vpack.c.bf16 %v1376, %v1372
      %v1442 = vmul.bf16 %v1377, 1069105081
      %v1443 = vpow.bf16.pop %v1442
      %v1445 = vmul.bf16 %v1378, 1069105081
      %v1446 = vpow.bf16.pop %v1445
      %v1448 = vmul.bf16 %v1379, 1069105081
      %v1449 = vpow.bf16.pop %v1448
      %v1451 = vmul.bf16 %v1380, 1069105081
      %v1452 = vpow.bf16.pop %v1451
      %v1454 = vmul.bf16 %v1381, 1069105081
      %v1455 = vpow.bf16.pop %v1454
      %v1457 = vmul.bf16 %v1382, 1069105081
      %v1458 = vpow.bf16.pop %v1457
      %v1460 = vmul.bf16 %v1383, 1069105081
      %v1461 = vpow.bf16.pop %v1460
      %v1463 = vmul.bf16 %v1384, 1069105081
      %v1464 = vpow.bf16.pop %v1463
      %v1466 = vmul.bf16 %v1385, 1069105081
      %v1467 = vpow.bf16.pop %v1466
      %v1469 = vmul.bf16 %v1386, 1069105081
      %v1470 = vpow.bf16.pop %v1469
      %v1472 = vmul.bf16 %v1387, 1069105081
      %v1473 = vpow.bf16.pop %v1472
      %v1475 = vmul.bf16 %v1388, 1069105081
      %v1476 = vpow.bf16.pop %v1475
      %v1478 = vmul.bf16 %v1389, 1069105081
      %v1479 = vpow.bf16.pop %v1478
      %v1481 = vmul.bf16 %v1390, 1069105081
      %v1482 = vpow.bf16.pop %v1481
      %v1484 = vmul.bf16 %v1391, 1069105081
      %v1485 = vpow.bf16.pop %v1484
      %v1487 = vmul.bf16 %v1392, 1069105081
      %v1488 = vpow.bf16.pop %v1487
      %v1490 = vmul.bf16 %v1393, 1069105081
      %v1491 = vpow.bf16.pop %v1490
      %v1493 = vmul.bf16 %v1394, 1069105081
      %v1494 = vpow.bf16.pop %v1493
      %v1496 = vmul.bf16 %v1395, 1069105081
      %v1497 = vpow.bf16.pop %v1496
      %v1499 = vmul.bf16 %v1396, 1069105081
      %v1500 = vpow.bf16.pop %v1499
      %v1502 = vmul.bf16 %v1397, 1069105081
      %v1503 = vpow.bf16.pop %v1502
      %v1505 = vmul.bf16 %v1398, 1069105081
      %v1506 = vpow.bf16.pop %v1505
      %v1508 = vmul.bf16 %v1399, 1069105081
      %v1509 = vpow.bf16.pop %v1508
      %v1511 = vmul.bf16 %v1400, 1069105081
      %v1512 = vpow.bf16.pop %v1511
      %v1514 = vmul.bf16 %v1401, 1069105081
      %v1515 = vpow.bf16.pop %v1514
      %v1517 = vmul.bf16 %v1402, 1069105081
      %v1518 = vpow.bf16.pop %v1517
      %v1520 = vmul.bf16 %v1403, 1069105081
      %v1521 = vpow.bf16.pop %v1520
      %v1523 = vmul.bf16 %v1404, 1069105081
      %v1524 = vpow.bf16.pop %v1523
      %v1526 = vmul.bf16 %v1405, 1069105081
      %v1527 = vpow.bf16.pop %v1526
      %v1529 = vmul.bf16 %v1406, 1069105081
      %v1530 = vpow.bf16.pop %v1529
      %v1532 = vmul.bf16 %v1407, 1069105081
      %v1533 = vpow.bf16.pop %v1532
      %v1535 = vmul.bf16 %v1408, 1069105081
      %v1536 = vpow.bf16.pop %v1535
      %v1538 = vmul.bf16 %v1409, 1069105081
      %v1539 = vpow.bf16.pop %v1538
      %v1541 = vmul.bf16 %v1410, 1069105081
      %v1542 = vpow.bf16.pop %v1541
      %v1544 = vmul.bf16 %v1411, 1069105081
      %v1545 = vpow.bf16.pop %v1544
      %v1547 = vmul.bf16 %v1412, 1069105081
      %v1548 = vpow.bf16.pop %v1547
      %v1550 = vmul.bf16 %v1413, 1069105081
      %v1551 = vpow.bf16.pop %v1550
      %v1553 = vmul.bf16 %v1414, 1069105081
      %v1554 = vpow.bf16.pop %v1553
      %v1556 = vmul.bf16 %v1415, 1069105081
      %v1557 = vpow.bf16.pop %v1556
      %v1559 = vmul.bf16 %v1416, 1069105081
      %v1560 = vpow.bf16.pop %v1559
      %v1562 = vmul.bf16 %v1417, 1069105081
      %v1563 = vpow.bf16.pop %v1562
      %v1565 = vmul.bf16 %v1418, 1069105081
      %v1566 = vpow.bf16.pop %v1565
      %v1568 = vmul.bf16 %v1419, 1069105081
      %v1569 = vpow.bf16.pop %v1568
      %v1571 = vmul.bf16 %v1420, 1069105081
      %v1572 = vpow.bf16.pop %v1571
      %v1574 = vmul.bf16 %v1421, 1069105081
      %v1575 = vpow.bf16.pop %v1574
      %v1577 = vmul.bf16 %v1422, 1069105081
      %v1578 = vpow.bf16.pop %v1577
      %v1580 = vmul.bf16 %v1423, 1069105081
      %v1581 = vpow.bf16.pop %v1580
      %v1583 = vmul.bf16 %v1424, 1069105081
      %v1584 = vpow.bf16.pop %v1583
      %v1586 = vmul.bf16 %v1425, 1069105081
      %v1587 = vpow.bf16.pop %v1586
      %v1589 = vmul.bf16 %v1426, 1069105081
      %v1590 = vpow.bf16.pop %v1589
      %v1592 = vmul.bf16 %v1427, 1069105081
      %v1593 = vpow.bf16.pop %v1592
      %v1595 = vmul.bf16 %v1428, 1069105081
      %v1596 = vpow.bf16.pop %v1595
      %v1598 = vmul.bf16 %v1429, 1069105081
      %v1599 = vpow.bf16.pop %v1598
      %v1601 = vmul.bf16 %v1430, 1069105081
      %v1602 = vpow.bf16.pop %v1601
      %v1604 = vmul.bf16 %v1431, 1069105081
      %v1605 = vpow.bf16.pop %v1604
      %v1607 = vmul.bf16 %v1432, 1069105081
      %v1608 = vpow.bf16.pop %v1607
      %v1610 = vmul.bf16 %v1433, 1069105081
      %v1611 = vpow.bf16.pop %v1610
      %v1613 = vmul.bf16 %v1434, 1069105081
      %v1614 = vpow.bf16.pop %v1613
      %v1616 = vmul.bf16 %v1435, 1069105081
      %v1617 = vpow.bf16.pop %v1616
      %v1619 = vmul.bf16 %v1436, 1069105081
      %v1620 = vpow.bf16.pop %v1619
      %v1622 = vmul.bf16 %v1437, 1069105081
      %v1623 = vpow.bf16.pop %v1622
      %v1625 = vmul.bf16 %v1438, 1069105081
      %v1626 = vpow.bf16.pop %v1625
      %v1628 = vmul.bf16 %v1439, 1069105081
      %v1629 = vpow.bf16.pop %v1628
      %v1631 = vmul.bf16 %v1440, 1069105081
      %v1632 = vpow.bf16.pop %v1631
      %v1633 = vunpack.c.l.bf16 %v1443
      %v1634 = vunpack.c.l.bf16 %v1446
      %v1635 = vunpack.c.l.bf16 %v1449
      %v1636 = vunpack.c.l.bf16 %v1452
      %v1637 = vunpack.c.h.bf16 %v1443
      %v1638 = vunpack.c.h.bf16 %v1446
      %v1639 = vunpack.c.h.bf16 %v1449
      %v1640 = vunpack.c.h.bf16 %v1452
      %v1641 = vunpack.c.l.bf16 %v1455
      %v1642 = vunpack.c.l.bf16 %v1458
      %v1643 = vunpack.c.l.bf16 %v1461
      %v1644 = vunpack.c.l.bf16 %v1464
      %v1645 = vunpack.c.h.bf16 %v1455
      %v1646 = vunpack.c.h.bf16 %v1458
      %v1647 = vunpack.c.h.bf16 %v1461
      %v1648 = vunpack.c.h.bf16 %v1464
      %v1649 = vunpack.c.l.bf16 %v1467
      %v1650 = vunpack.c.l.bf16 %v1470
      %v1651 = vunpack.c.l.bf16 %v1473
      %v1652 = vunpack.c.l.bf16 %v1476
      %v1653 = vunpack.c.h.bf16 %v1467
      %v1654 = vunpack.c.h.bf16 %v1470
      %v1655 = vunpack.c.h.bf16 %v1473
      %v1656 = vunpack.c.h.bf16 %v1476
      %v1657 = vunpack.c.l.bf16 %v1479
      %v1658 = vunpack.c.l.bf16 %v1482
      %v1659 = vunpack.c.l.bf16 %v1485
      %v1660 = vunpack.c.l.bf16 %v1488
      %v1661 = vunpack.c.h.bf16 %v1479
      %v1662 = vunpack.c.h.bf16 %v1482
      %v1663 = vunpack.c.h.bf16 %v1485
      %v1664 = vunpack.c.h.bf16 %v1488
      %v1665 = vunpack.c.l.bf16 %v1491
      %v1666 = vunpack.c.l.bf16 %v1494
      %v1667 = vunpack.c.l.bf16 %v1497
      %v1668 = vunpack.c.l.bf16 %v1500
      %v1669 = vunpack.c.h.bf16 %v1491
      %v1670 = vunpack.c.h.bf16 %v1494
      %v1671 = vunpack.c.h.bf16 %v1497
      %v1672 = vunpack.c.h.bf16 %v1500
      %v1673 = vunpack.c.l.bf16 %v1503
      %v1674 = vunpack.c.l.bf16 %v1506
      %v1675 = vunpack.c.l.bf16 %v1509
      %v1676 = vunpack.c.l.bf16 %v1512
      %v1677 = vunpack.c.h.bf16 %v1503
      %v1678 = vunpack.c.h.bf16 %v1506
      %v1679 = vunpack.c.h.bf16 %v1509
      %v1680 = vunpack.c.h.bf16 %v1512
      %v1681 = vunpack.c.l.bf16 %v1515
      %v1682 = vunpack.c.l.bf16 %v1518
      %v1683 = vunpack.c.l.bf16 %v1521
      %v1684 = vunpack.c.l.bf16 %v1524
      %v1685 = vunpack.c.h.bf16 %v1515
      %v1686 = vunpack.c.h.bf16 %v1518
      %v1687 = vunpack.c.h.bf16 %v1521
      %v1688 = vunpack.c.h.bf16 %v1524
      %v1689 = vunpack.c.l.bf16 %v1527
      %v1690 = vunpack.c.l.bf16 %v1530
      %v1691 = vunpack.c.l.bf16 %v1533
      %v1692 = vunpack.c.l.bf16 %v1536
      %v1693 = vunpack.c.h.bf16 %v1527
      %v1694 = vunpack.c.h.bf16 %v1530
      %v1695 = vunpack.c.h.bf16 %v1533
      %v1696 = vunpack.c.h.bf16 %v1536
      %v1697 = vunpack.c.l.bf16 %v1539
      %v1698 = vunpack.c.l.bf16 %v1542
      %v1699 = vunpack.c.l.bf16 %v1545
      %v1700 = vunpack.c.l.bf16 %v1548
      %v1701 = vunpack.c.h.bf16 %v1539
      %v1702 = vunpack.c.h.bf16 %v1542
      %v1703 = vunpack.c.h.bf16 %v1545
      %v1704 = vunpack.c.h.bf16 %v1548
      %v1705 = vunpack.c.l.bf16 %v1551
      %v1706 = vunpack.c.l.bf16 %v1554
      %v1707 = vunpack.c.l.bf16 %v1557
      %v1708 = vunpack.c.l.bf16 %v1560
      %v1709 = vunpack.c.h.bf16 %v1551
      %v1710 = vunpack.c.h.bf16 %v1554
      %v1711 = vunpack.c.h.bf16 %v1557
      %v1712 = vunpack.c.h.bf16 %v1560
      %v1713 = vunpack.c.l.bf16 %v1563
      %v1714 = vunpack.c.l.bf16 %v1566
      %v1715 = vunpack.c.l.bf16 %v1569
      %v1716 = vunpack.c.l.bf16 %v1572
      %v1717 = vunpack.c.h.bf16 %v1563
      %v1718 = vunpack.c.h.bf16 %v1566
      %v1719 = vunpack.c.h.bf16 %v1569
      %v1720 = vunpack.c.h.bf16 %v1572
      %v1721 = vunpack.c.l.bf16 %v1575
      %v1722 = vunpack.c.l.bf16 %v1578
      %v1723 = vunpack.c.l.bf16 %v1581
      %v1724 = vunpack.c.l.bf16 %v1584
      %v1725 = vunpack.c.h.bf16 %v1575
      %v1726 = vunpack.c.h.bf16 %v1578
      %v1727 = vunpack.c.h.bf16 %v1581
      %v1728 = vunpack.c.h.bf16 %v1584
      %v1729 = vunpack.c.l.bf16 %v1587
      %v1730 = vunpack.c.l.bf16 %v1590
      %v1731 = vunpack.c.l.bf16 %v1593
      %v1732 = vunpack.c.l.bf16 %v1596
      %v1733 = vunpack.c.h.bf16 %v1587
      %v1734 = vunpack.c.h.bf16 %v1590
      %v1735 = vunpack.c.h.bf16 %v1593
      %v1736 = vunpack.c.h.bf16 %v1596
      %v1737 = vunpack.c.l.bf16 %v1599
      %v1738 = vunpack.c.l.bf16 %v1602
      %v1739 = vunpack.c.l.bf16 %v1605
      %v1740 = vunpack.c.l.bf16 %v1608
      %v1741 = vunpack.c.h.bf16 %v1599
      %v1742 = vunpack.c.h.bf16 %v1602
      %v1743 = vunpack.c.h.bf16 %v1605
      %v1744 = vunpack.c.h.bf16 %v1608
      %v1745 = vunpack.c.l.bf16 %v1611
      %v1746 = vunpack.c.l.bf16 %v1614
      %v1747 = vunpack.c.l.bf16 %v1617
      %v1748 = vunpack.c.l.bf16 %v1620
      %v1749 = vunpack.c.h.bf16 %v1611
      %v1750 = vunpack.c.h.bf16 %v1614
      %v1751 = vunpack.c.h.bf16 %v1617
      %v1752 = vunpack.c.h.bf16 %v1620
      %v1753 = vunpack.c.l.bf16 %v1623
      %v1754 = vunpack.c.l.bf16 %v1626
      %v1755 = vunpack.c.l.bf16 %v1629
      %v1756 = vunpack.c.l.bf16 %v1632
      %v1757 = vunpack.c.h.bf16 %v1623
      %v1758 = vunpack.c.h.bf16 %v1626
      %v1759 = vunpack.c.h.bf16 %v1629
      %v1760 = vunpack.c.h.bf16 %v1632
      %v1761 = vadd.f32 %v1633, %v1634
      %v1762 = vadd.f32 %v1761, %v1635
      %v1763 = vadd.f32 %v1762, %v1636
      %1764 = vadd.xlane.f32.xlu0 %v1763
      %v1765 = vpop.xlane.xlu0 %1764
      %v1766 = vadd.f32 %v1637, %v1638
      %v1767 = vadd.f32 %v1766, %v1639
      %v1768 = vadd.f32 %v1767, %v1640
      %1769 = vadd.xlane.f32.xlu0 %v1768
      %v1770 = vpop.xlane.xlu0 %1769
      %v1771 = vadd.f32 %v1641, %v1642
      %v1772 = vadd.f32 %v1771, %v1643
      %v1773 = vadd.f32 %v1772, %v1644
      %1774 = vadd.xlane.f32.xlu0 %v1773
      %v1775 = vpop.xlane.xlu0 %1774
      %v1776 = vadd.f32 %v1645, %v1646
      %v1777 = vadd.f32 %v1776, %v1647
      %v1778 = vadd.f32 %v1777, %v1648
      %1779 = vadd.xlane.f32.xlu0 %v1778
      %v1780 = vpop.xlane.xlu0 %1779
      %v1781 = vadd.f32 %v1649, %v1650
      %v1782 = vadd.f32 %v1781, %v1651
      %v1783 = vadd.f32 %v1782, %v1652
      %1784 = vadd.xlane.f32.xlu0 %v1783
      %v1785 = vpop.xlane.xlu0 %1784
      %v1786 = vadd.f32 %v1653, %v1654
      %v1787 = vadd.f32 %v1786, %v1655
      %v1788 = vadd.f32 %v1787, %v1656
      %1789 = vadd.xlane.f32.xlu0 %v1788
      %v1790 = vpop.xlane.xlu0 %1789
      %v1791 = vadd.f32 %v1657, %v1658
      %v1792 = vadd.f32 %v1791, %v1659
      %v1793 = vadd.f32 %v1792, %v1660
      %1794 = vadd.xlane.f32.xlu0 %v1793
      %v1795 = vpop.xlane.xlu0 %1794
      %v1796 = vadd.f32 %v1661, %v1662
      %v1797 = vadd.f32 %v1796, %v1663
      %v1798 = vadd.f32 %v1797, %v1664
      %1799 = vadd.xlane.f32.xlu0 %v1798
      %v1800 = vpop.xlane.xlu0 %1799
      %v1801 = vadd.f32 %v1665, %v1666
      %v1802 = vadd.f32 %v1801, %v1667
      %v1803 = vadd.f32 %v1802, %v1668
      %1804 = vadd.xlane.f32.xlu0 %v1803
      %v1805 = vpop.xlane.xlu0 %1804
      %v1806 = vadd.f32 %v1669, %v1670
      %v1807 = vadd.f32 %v1806, %v1671
      %v1808 = vadd.f32 %v1807, %v1672
      %1809 = vadd.xlane.f32.xlu0 %v1808
      %v1810 = vpop.xlane.xlu0 %1809
      %v1811 = vadd.f32 %v1673, %v1674
      %v1812 = vadd.f32 %v1811, %v1675
      %v1813 = vadd.f32 %v1812, %v1676
      %1814 = vadd.xlane.f32.xlu0 %v1813
      %v1815 = vpop.xlane.xlu0 %1814
      %v1816 = vadd.f32 %v1677, %v1678
      %v1817 = vadd.f32 %v1816, %v1679
      %v1818 = vadd.f32 %v1817, %v1680
      %1819 = vadd.xlane.f32.xlu0 %v1818
      %v1820 = vpop.xlane.xlu0 %1819
      %v1821 = vadd.f32 %v1681, %v1682
      %v1822 = vadd.f32 %v1821, %v1683
      %v1823 = vadd.f32 %v1822, %v1684
      %1824 = vadd.xlane.f32.xlu0 %v1823
      %v1825 = vpop.xlane.xlu0 %1824
      %v1826 = vadd.f32 %v1685, %v1686
      %v1827 = vadd.f32 %v1826, %v1687
      %v1828 = vadd.f32 %v1827, %v1688
      %1829 = vadd.xlane.f32.xlu0 %v1828
      %v1830 = vpop.xlane.xlu0 %1829
      %v1831 = vadd.f32 %v1689, %v1690
      %v1832 = vadd.f32 %v1831, %v1691
      %v1833 = vadd.f32 %v1832, %v1692
      %1834 = vadd.xlane.f32.xlu0 %v1833
      %v1835 = vpop.xlane.xlu0 %1834
      %v1836 = vadd.f32 %v1693, %v1694
      %v1837 = vadd.f32 %v1836, %v1695
      %v1838 = vadd.f32 %v1837, %v1696
      %1839 = vadd.xlane.f32.xlu0 %v1838
      %v1840 = vpop.xlane.xlu0 %1839
      %v1841 = vadd.f32 %v1697, %v1698
      %v1842 = vadd.f32 %v1841, %v1699
      %v1843 = vadd.f32 %v1842, %v1700
      %1844 = vadd.xlane.f32.xlu0 %v1843
      %v1845 = vpop.xlane.xlu0 %1844
      %v1846 = vadd.f32 %v1701, %v1702
      %v1847 = vadd.f32 %v1846, %v1703
      %v1848 = vadd.f32 %v1847, %v1704
      %1849 = vadd.xlane.f32.xlu0 %v1848
      %v1850 = vpop.xlane.xlu0 %1849
      %v1851 = vadd.f32 %v1705, %v1706
      %v1852 = vadd.f32 %v1851, %v1707
      %v1853 = vadd.f32 %v1852, %v1708
      %1854 = vadd.xlane.f32.xlu0 %v1853
      %v1855 = vpop.xlane.xlu0 %1854
      %v1856 = vadd.f32 %v1709, %v1710
      %v1857 = vadd.f32 %v1856, %v1711
      %v1858 = vadd.f32 %v1857, %v1712
      %1859 = vadd.xlane.f32.xlu0 %v1858
      %v1860 = vpop.xlane.xlu0 %1859
      %v1861 = vadd.f32 %v1713, %v1714
      %v1862 = vadd.f32 %v1861, %v1715
      %v1863 = vadd.f32 %v1862, %v1716
      %1864 = vadd.xlane.f32.xlu0 %v1863
      %v1865 = vpop.xlane.xlu0 %1864
      %v1866 = vadd.f32 %v1717, %v1718
      %v1867 = vadd.f32 %v1866, %v1719
      %v1868 = vadd.f32 %v1867, %v1720
      %1869 = vadd.xlane.f32.xlu0 %v1868
      %v1870 = vpop.xlane.xlu0 %1869
      %v1871 = vadd.f32 %v1721, %v1722
      %v1872 = vadd.f32 %v1871, %v1723
      %v1873 = vadd.f32 %v1872, %v1724
      %1874 = vadd.xlane.f32.xlu0 %v1873
      %v1875 = vpop.xlane.xlu0 %1874
      %v1876 = vadd.f32 %v1725, %v1726
      %v1877 = vadd.f32 %v1876, %v1727
      %v1878 = vadd.f32 %v1877, %v1728
      %1879 = vadd.xlane.f32.xlu0 %v1878
      %v1880 = vpop.xlane.xlu0 %1879
      %v1881 = vadd.f32 %v1729, %v1730
      %v1882 = vadd.f32 %v1881, %v1731
      %v1883 = vadd.f32 %v1882, %v1732
      %1884 = vadd.xlane.f32.xlu0 %v1883
      %v1885 = vpop.xlane.xlu0 %1884
      %v1886 = vadd.f32 %v1733, %v1734
      %v1887 = vadd.f32 %v1886, %v1735
      %v1888 = vadd.f32 %v1887, %v1736
      %1889 = vadd.xlane.f32.xlu0 %v1888
      %v1890 = vpop.xlane.xlu0 %1889
      %v1891 = vadd.f32 %v1737, %v1738
      %v1892 = vadd.f32 %v1891, %v1739
      %v1893 = vadd.f32 %v1892, %v1740
      %1894 = vadd.xlane.f32.xlu0 %v1893
      %v1895 = vpop.xlane.xlu0 %1894
      %v1896 = vadd.f32 %v1741, %v1742
      %v1897 = vadd.f32 %v1896, %v1743
      %v1898 = vadd.f32 %v1897, %v1744
      %1899 = vadd.xlane.f32.xlu0 %v1898
      %v1900 = vpop.xlane.xlu0 %1899
      %v1901 = vadd.f32 %v1745, %v1746
      %v1902 = vadd.f32 %v1901, %v1747
      %v1903 = vadd.f32 %v1902, %v1748
      %1904 = vadd.xlane.f32.xlu0 %v1903
      %v1905 = vpop.xlane.xlu0 %1904
      %v1906 = vadd.f32 %v1749, %v1750
      %v1907 = vadd.f32 %v1906, %v1751
      %v1908 = vadd.f32 %v1907, %v1752
      %1909 = vadd.xlane.f32.xlu0 %v1908
      %v1910 = vpop.xlane.xlu0 %1909
      %v1911 = vadd.f32 %v1753, %v1754
      %v1912 = vadd.f32 %v1911, %v1755
      %v1913 = vadd.f32 %v1912, %v1756
      %1914 = vadd.xlane.f32.xlu0 %v1913
      %v1915 = vpop.xlane.xlu0 %1914
      %v1916 = vadd.f32 %v1757, %v1758
      %v1917 = vadd.f32 %v1916, %v1759
      %v1918 = vadd.f32 %v1917, %v1760
      %1919 = vadd.xlane.f32.xlu0 %v1918
      %v1920 = vpop.xlane.xlu0 %1919
      %1921 = vmatprep.subr.bf16.mxu0 %v609
      %1922 = vmatpush1.bf16.xpose.msra.mxu0 %v608
      %1923 = vmatprep.subr.bf16.mxu0 0
      %1924 = vmatpush1.bf16.xpose.msra.mxu0 0
      %1925 = vmatprep.subr.bf16.mxu0 0
      %1926 = vmatpush1.bf16.xpose.msra.mxu0 0
      %1927 = vmatprep.subr.bf16.mxu0 0
      %1928 = vmatpush1.bf16.xpose.msra.mxu0 0
      %1929 = vmatprep.subr.bf16.mxu0 0
      %1930 = vmatpush1.bf16.xpose.msra.mxu0 0
      %1931 = vmatprep.subr.bf16.mxu0 0
      %1932 = vmatpush1.bf16.xpose.msra.mxu0 0
      %1933 = vmatprep.subr.bf16.mxu0 0
      %1934 = vmatpush1.bf16.xpose.msra.mxu0 0
      %1935 = vmatprep.subr.bf16.mxu0 0
      %1936 = vmatpush1.bf16.xpose.msra.mxu0 0
      %1937 = vmatprep.subr.bf16.mxu0 0
      %1938 = vmatpush1.bf16.xpose.msra.mxu0 0
      %1939 = vmatprep.subr.bf16.mxu0 0
      %1940 = vmatpush1.bf16.xpose.msra.mxu0 0
      %1941 = vmatprep.subr.bf16.mxu0 0
      %1942 = vmatpush1.bf16.xpose.msra.mxu0 0
      %1943 = vmatprep.subr.bf16.mxu0 0
      %1944 = vmatpush1.bf16.xpose.msra.mxu0 0
      %1945 = vmatprep.subr.bf16.mxu0 0
      %1946 = vmatpush1.bf16.xpose.msra.mxu0 0
      %1947 = vmatprep.subr.bf16.mxu0 0
      %1948 = vmatpush1.bf16.xpose.msra.mxu0 0
      %1949 = vmatprep.subr.bf16.mxu0 0
      %1950 = vmatpush1.bf16.xpose.msra.mxu0 0
      %1951 = vmatprep.subr.bf16.mxu0 0
      %1952 = vmatpush1.bf16.xpose.msra.mxu0 0
      %1953 = vmatprep.mubr.bf16.mxu0 %v1446
      %1954 = vmatmul.mubr.bf16.gmra.mrb[0].mxu0 %v1443
      %v1955 = vpop.f32.mrb[0].mxu0
      %v1956 = vadd.f32 0.0, %v1955
      %v1957 = vpop.f32.mrb[0].mxu0
      %v1958 = vpop.f32.mrb[0].mxu0
      %v1959 = vadd.f32 0.0, %v1958
      %v1960 = vpop.f32.mrb[0].mxu0
      %1961 = vmatprep.mubr.bf16.mxu0 %v1458
      %1962 = vmatmul.mubr.bf16.gmra.mrb[0].mxu0 %v1455
      %v1963 = vpop.f32.mrb[0].mxu0
      %v1964 = vadd.f32 0.0, %v1963
      %v1965 = vpop.f32.mrb[0].mxu0
      %v1966 = vpop.f32.mrb[0].mxu0
      %v1967 = vadd.f32 0.0, %v1966
      %v1968 = vpop.f32.mrb[0].mxu0
      %1969 = vmatprep.mubr.bf16.mxu0 %v1470
      %1970 = vmatmul.mubr.bf16.gmra.mrb[0].mxu0 %v1467
      %v1971 = vpop.f32.mrb[0].mxu0
      %v1972 = vadd.f32 0.0, %v1971
      %v1973 = vpop.f32.mrb[0].mxu0
      %v1974 = vpop.f32.mrb[0].mxu0
      %v1975 = vadd.f32 0.0, %v1974
      %v1976 = vpop.f32.mrb[0].mxu0
      %1977 = vmatprep.mubr.bf16.mxu0 %v1482
      %1978 = vmatmul.mubr.bf16.gmra.mrb[0].mxu0 %v1479
      %v1979 = vpop.f32.mrb[0].mxu0
      %v1980 = vadd.f32 0.0, %v1979
      %v1981 = vpop.f32.mrb[0].mxu0
      %v1982 = vpop.f32.mrb[0].mxu0
      %v1983 = vadd.f32 0.0, %v1982
      %v1984 = vpop.f32.mrb[0].mxu0
      %1985 = vmatprep.mubr.bf16.mxu0 %v1494
      %1986 = vmatmul.mubr.bf16.gmra.mrb[0].mxu0 %v1491
      %v1987 = vpop.f32.mrb[0].mxu0
      %v1988 = vadd.f32 0.0, %v1987
      %v1989 = vpop.f32.mrb[0].mxu0
      %v1990 = vpop.f32.mrb[0].mxu0
      %v1991 = vadd.f32 0.0, %v1990
      %v1992 = vpop.f32.mrb[0].mxu0
      %1993 = vmatprep.mubr.bf16.mxu0 %v1506
      %1994 = vmatmul.mubr.bf16.gmra.mrb[0].mxu0 %v1503
      %v1995 = vpop.f32.mrb[0].mxu0
      %v1996 = vadd.f32 0.0, %v1995
      %v1997 = vpop.f32.mrb[0].mxu0
      %v1998 = vpop.f32.mrb[0].mxu0
      %v1999 = vadd.f32 0.0, %v1998
      %v2000 = vpop.f32.mrb[0].mxu0
      %2001 = vmatprep.mubr.bf16.mxu0 %v1518
      %2002 = vmatmul.mubr.bf16.gmra.mrb[0].mxu0 %v1515
      %v2003 = vpop.f32.mrb[0].mxu0
      %v2004 = vadd.f32 0.0, %v2003
      %v2005 = vpop.f32.mrb[0].mxu0
      %v2006 = vpop.f32.mrb[0].mxu0
      %v2007 = vadd.f32 0.0, %v2006
      %v2008 = vpop.f32.mrb[0].mxu0
      %2009 = vmatprep.mubr.bf16.mxu0 %v1530
      %2010 = vmatmul.mubr.bf16.gmra.mrb[0].mxu0 %v1527
      %v2011 = vpop.f32.mrb[0].mxu0
      %v2012 = vadd.f32 0.0, %v2011
      %v2013 = vpop.f32.mrb[0].mxu0
      %v2014 = vpop.f32.mrb[0].mxu0
      %v2015 = vadd.f32 0.0, %v2014
      %v2016 = vpop.f32.mrb[0].mxu0
      %2017 = vmatprep.mubr.bf16.mxu0 %v1542
      %2018 = vmatmul.mubr.bf16.gmra.mrb[0].mxu0 %v1539
      %v2019 = vpop.f32.mrb[0].mxu0
      %v2020 = vadd.f32 0.0, %v2019
      %v2021 = vpop.f32.mrb[0].mxu0
      %v2022 = vpop.f32.mrb[0].mxu0
      %v2023 = vadd.f32 0.0, %v2022
      %v2024 = vpop.f32.mrb[0].mxu0
      %2025 = vmatprep.mubr.bf16.mxu0 %v1554
      %2026 = vmatmul.mubr.bf16.gmra.mrb[0].mxu0 %v1551
      %v2027 = vpop.f32.mrb[0].mxu0
      %v2028 = vadd.f32 0.0, %v2027
      %v2029 = vpop.f32.mrb[0].mxu0
      %v2030 = vpop.f32.mrb[0].mxu0
      %v2031 = vadd.f32 0.0, %v2030
      %v2032 = vpop.f32.mrb[0].mxu0
      %2033 = vmatprep.mubr.bf16.mxu0 %v1566
      %2034 = vmatmul.mubr.bf16.gmra.mrb[0].mxu0 %v1563
      %v2035 = vpop.f32.mrb[0].mxu0
      %v2036 = vadd.f32 0.0, %v2035
      %v2037 = vpop.f32.mrb[0].mxu0
      %v2038 = vpop.f32.mrb[0].mxu0
      %v2039 = vadd.f32 0.0, %v2038
      %v2040 = vpop.f32.mrb[0].mxu0
      %2041 = vmatprep.mubr.bf16.mxu0 %v1578
      %2042 = vmatmul.mubr.bf16.gmra.mrb[0].mxu0 %v1575
      %v2043 = vpop.f32.mrb[0].mxu0
      %v2044 = vadd.f32 0.0, %v2043
      %v2045 = vpop.f32.mrb[0].mxu0
      %v2046 = vpop.f32.mrb[0].mxu0
      %v2047 = vadd.f32 0.0, %v2046
      %v2048 = vpop.f32.mrb[0].mxu0
      %2049 = vmatprep.mubr.bf16.mxu0 %v1590
      %2050 = vmatmul.mubr.bf16.gmra.mrb[0].mxu0 %v1587
      %v2051 = vpop.f32.mrb[0].mxu0
      %v2052 = vadd.f32 0.0, %v2051
      %v2053 = vpop.f32.mrb[0].mxu0
      %v2054 = vpop.f32.mrb[0].mxu0
      %v2055 = vadd.f32 0.0, %v2054
      %v2056 = vpop.f32.mrb[0].mxu0
      %2057 = vmatprep.mubr.bf16.mxu0 %v1602
      %2058 = vmatmul.mubr.bf16.gmra.mrb[0].mxu0 %v1599
      %v2059 = vpop.f32.mrb[0].mxu0
      %v2060 = vadd.f32 0.0, %v2059
      %v2061 = vpop.f32.mrb[0].mxu0
      %v2062 = vpop.f32.mrb[0].mxu0
      %v2063 = vadd.f32 0.0, %v2062
      %v2064 = vpop.f32.mrb[0].mxu0
      %2065 = vmatprep.mubr.bf16.mxu0 %v1614
      %2066 = vmatmul.mubr.bf16.gmra.mrb[0].mxu0 %v1611
      %v2067 = vpop.f32.mrb[0].mxu0
      %v2068 = vadd.f32 0.0, %v2067
      %v2069 = vpop.f32.mrb[0].mxu0
      %v2070 = vpop.f32.mrb[0].mxu0
      %v2071 = vadd.f32 0.0, %v2070
      %v2072 = vpop.f32.mrb[0].mxu0
      %2073 = vmatprep.mubr.bf16.mxu0 %v1626
      %2074 = vmatmul.mubr.bf16.gmra.mrb[0].mxu0 %v1623
      %v2075 = vpop.f32.mrb[0].mxu0
      %v2076 = vadd.f32 0.0, %v2075
      %v2077 = vpop.f32.mrb[0].mxu0
      %v2078 = vpop.f32.mrb[0].mxu0
      %v2079 = vadd.f32 0.0, %v2078
      %v2080 = vpop.f32.mrb[0].mxu0
      %2081 = vdwg.mxu0
      %2082 = vmatprep.subr.bf16.mxu0 %v611
      %2083 = vmatpush1.bf16.xpose.msra.mxu0 %v610
      %2084 = vmatprep.subr.bf16.mxu0 0
      %2085 = vmatpush1.bf16.xpose.msra.mxu0 0
      %2086 = vmatprep.subr.bf16.mxu0 0
      %2087 = vmatpush1.bf16.xpose.msra.mxu0 0
      %2088 = vmatprep.subr.bf16.mxu0 0
      %2089 = vmatpush1.bf16.xpose.msra.mxu0 0
      %2090 = vmatprep.subr.bf16.mxu0 0
      %2091 = vmatpush1.bf16.xpose.msra.mxu0 0
      %2092 = vmatprep.subr.bf16.mxu0 0
      %2093 = vmatpush1.bf16.xpose.msra.mxu0 0
      %2094 = vmatprep.subr.bf16.mxu0 0
      %2095 = vmatpush1.bf16.xpose.msra.mxu0 0
      %2096 = vmatprep.subr.bf16.mxu0 0
      %2097 = vmatpush1.bf16.xpose.msra.mxu0 0
      %2098 = vmatprep.subr.bf16.mxu0 0
      %2099 = vmatpush1.bf16.xpose.msra.mxu0 0
      %2100 = vmatprep.subr.bf16.mxu0 0
      %2101 = vmatpush1.bf16.xpose.msra.mxu0 0
      %2102 = vmatprep.subr.bf16.mxu0 0
      %2103 = vmatpush1.bf16.xpose.msra.mxu0 0
      %2104 = vmatprep.subr.bf16.mxu0 0
      %2105 = vmatpush1.bf16.xpose.msra.mxu0 0
      %2106 = vmatprep.subr.bf16.mxu0 0
      %2107 = vmatpush1.bf16.xpose.msra.mxu0 0
      %2108 = vmatprep.subr.bf16.mxu0 0
      %2109 = vmatpush1.bf16.xpose.msra.mxu0 0
      %2110 = vmatprep.subr.bf16.mxu0 0
      %2111 = vmatpush1.bf16.xpose.msra.mxu0 0
      %2112 = vmatprep.subr.bf16.mxu0 0
      %2113 = vmatpush1.bf16.xpose.msra.mxu0 0
      %2114 = vmatprep.mubr.bf16.mxu0 %v1452
      %2115 = vmatmul.mubr.bf16.gmra.mrb[0].mxu0 %v1449
      %v2116 = vpop.f32.mrb[0].mxu0
      %v2117 = vadd.f32 %v1956, %v2116
      %v2118 = vpop.f32.mrb[0].mxu0
      %v2119 = vpop.f32.mrb[0].mxu0
      %v2120 = vadd.f32 %v1959, %v2119
      %v2121 = vpop.f32.mrb[0].mxu0
      %2122 = vmatprep.mubr.bf16.mxu0 %v1464
      %2123 = vmatmul.mubr.bf16.gmra.mrb[0].mxu0 %v1461
      %v2124 = vpop.f32.mrb[0].mxu0
      %v2125 = vadd.f32 %v1964, %v2124
      %v2126 = vpop.f32.mrb[0].mxu0
      %v2127 = vpop.f32.mrb[0].mxu0
      %v2128 = vadd.f32 %v1967, %v2127
      %v2129 = vpop.f32.mrb[0].mxu0
      %2130 = vmatprep.mubr.bf16.mxu0 %v1476
      %2131 = vmatmul.mubr.bf16.gmra.mrb[0].mxu0 %v1473
      %v2132 = vpop.f32.mrb[0].mxu0
      %v2133 = vadd.f32 %v1972, %v2132
      %v2134 = vpop.f32.mrb[0].mxu0
      %v2135 = vpop.f32.mrb[0].mxu0
      %v2136 = vadd.f32 %v1975, %v2135
      %v2137 = vpop.f32.mrb[0].mxu0
      %2138 = vmatprep.mubr.bf16.mxu0 %v1488
      %2139 = vmatmul.mubr.bf16.gmra.mrb[0].mxu0 %v1485
      %v2140 = vpop.f32.mrb[0].mxu0
      %v2141 = vadd.f32 %v1980, %v2140
      %v2142 = vpop.f32.mrb[0].mxu0
      %v2143 = vpop.f32.mrb[0].mxu0
      %v2144 = vadd.f32 %v1983, %v2143
      %v2145 = vpop.f32.mrb[0].mxu0
      %2146 = vmatprep.mubr.bf16.mxu0 %v1500
      %2147 = vmatmul.mubr.bf16.gmra.mrb[0].mxu0 %v1497
      %v2148 = vpop.f32.mrb[0].mxu0
      %v2149 = vadd.f32 %v1988, %v2148
      %v2150 = vpop.f32.mrb[0].mxu0
      %v2151 = vpop.f32.mrb[0].mxu0
      %v2152 = vadd.f32 %v1991, %v2151
      %v2153 = vpop.f32.mrb[0].mxu0
      %2154 = vmatprep.mubr.bf16.mxu0 %v1512
      %2155 = vmatmul.mubr.bf16.gmra.mrb[0].mxu0 %v1509
      %v2156 = vpop.f32.mrb[0].mxu0
      %v2157 = vadd.f32 %v1996, %v2156
      %v2158 = vpop.f32.mrb[0].mxu0
      %v2159 = vpop.f32.mrb[0].mxu0
      %v2160 = vadd.f32 %v1999, %v2159
      %v2161 = vpop.f32.mrb[0].mxu0
      %2162 = vmatprep.mubr.bf16.mxu0 %v1524
      %2163 = vmatmul.mubr.bf16.gmra.mrb[0].mxu0 %v1521
      %v2164 = vpop.f32.mrb[0].mxu0
      %v2165 = vadd.f32 %v2004, %v2164
      %v2166 = vpop.f32.mrb[0].mxu0
      %v2167 = vpop.f32.mrb[0].mxu0
      %v2168 = vadd.f32 %v2007, %v2167
      %v2169 = vpop.f32.mrb[0].mxu0
      %2170 = vmatprep.mubr.bf16.mxu0 %v1536
      %2171 = vmatmul.mubr.bf16.gmra.mrb[0].mxu0 %v1533
      %v2172 = vpop.f32.mrb[0].mxu0
      %v2173 = vadd.f32 %v2012, %v2172
      %v2174 = vpop.f32.mrb[0].mxu0
      %v2175 = vpop.f32.mrb[0].mxu0
      %v2176 = vadd.f32 %v2015, %v2175
      %v2177 = vpop.f32.mrb[0].mxu0
      %2178 = vmatprep.mubr.bf16.mxu0 %v1548
      %2179 = vmatmul.mubr.bf16.gmra.mrb[0].mxu0 %v1545
      %v2180 = vpop.f32.mrb[0].mxu0
      %v2181 = vadd.f32 %v2020, %v2180
      %v2182 = vpop.f32.mrb[0].mxu0
      %v2183 = vpop.f32.mrb[0].mxu0
      %v2184 = vadd.f32 %v2023, %v2183
      %v2185 = vpop.f32.mrb[0].mxu0
      %2186 = vmatprep.mubr.bf16.mxu0 %v1560
      %2187 = vmatmul.mubr.bf16.gmra.mrb[0].mxu0 %v1557
      %v2188 = vpop.f32.mrb[0].mxu0
      %v2189 = vadd.f32 %v2028, %v2188
      %v2190 = vpop.f32.mrb[0].mxu0
      %v2191 = vpop.f32.mrb[0].mxu0
      %v2192 = vadd.f32 %v2031, %v2191
      %v2193 = vpop.f32.mrb[0].mxu0
      %2194 = vmatprep.mubr.bf16.mxu0 %v1572
      %2195 = vmatmul.mubr.bf16.gmra.mrb[0].mxu0 %v1569
      %v2196 = vpop.f32.mrb[0].mxu0
      %v2197 = vadd.f32 %v2036, %v2196
      %v2198 = vpop.f32.mrb[0].mxu0
      %v2199 = vpop.f32.mrb[0].mxu0
      %v2200 = vadd.f32 %v2039, %v2199
      %v2201 = vpop.f32.mrb[0].mxu0
      %2202 = vmatprep.mubr.bf16.mxu0 %v1584
      %2203 = vmatmul.mubr.bf16.gmra.mrb[0].mxu0 %v1581
      %v2204 = vpop.f32.mrb[0].mxu0
      %v2205 = vadd.f32 %v2044, %v2204
      %v2206 = vpop.f32.mrb[0].mxu0
      %v2207 = vpop.f32.mrb[0].mxu0
      %v2208 = vadd.f32 %v2047, %v2207
      %v2209 = vpop.f32.mrb[0].mxu0
      %2210 = vmatprep.mubr.bf16.mxu0 %v1596
      %2211 = vmatmul.mubr.bf16.gmra.mrb[0].mxu0 %v1593
      %v2212 = vpop.f32.mrb[0].mxu0
      %v2213 = vadd.f32 %v2052, %v2212
      %v2214 = vpop.f32.mrb[0].mxu0
      %v2215 = vpop.f32.mrb[0].mxu0
      %v2216 = vadd.f32 %v2055, %v2215
      %v2217 = vpop.f32.mrb[0].mxu0
      %2218 = vmatprep.mubr.bf16.mxu0 %v1608
      %2219 = vmatmul.mubr.bf16.gmra.mrb[0].mxu0 %v1605
      %v2220 = vpop.f32.mrb[0].mxu0
      %v2221 = vadd.f32 %v2060, %v2220
      %v2222 = vpop.f32.mrb[0].mxu0
      %v2223 = vpop.f32.mrb[0].mxu0
      %v2224 = vadd.f32 %v2063, %v2223
      %v2225 = vpop.f32.mrb[0].mxu0
      %2226 = vmatprep.mubr.bf16.mxu0 %v1620
      %2227 = vmatmul.mubr.bf16.gmra.mrb[0].mxu0 %v1617
      %v2228 = vpop.f32.mrb[0].mxu0
      %v2229 = vadd.f32 %v2068, %v2228
      %v2230 = vpop.f32.mrb[0].mxu0
      %v2231 = vpop.f32.mrb[0].mxu0
      %v2232 = vadd.f32 %v2071, %v2231
      %v2233 = vpop.f32.mrb[0].mxu0
      %2234 = vmatprep.mubr.bf16.mxu0 %v1632
      %2235 = vmatmul.mubr.bf16.gmra.mrb[0].mxu0 %v1629
      %v2236 = vpop.f32.mrb[0].mxu0
      %v2237 = vadd.f32 %v2076, %v2236
      %v2238 = vpop.f32.mrb[0].mxu0
      %v2239 = vpop.f32.mrb[0].mxu0
      %v2240 = vadd.f32 %v2079, %v2239
      %v2241 = vpop.f32.mrb[0].mxu0
      %2242 = vdwg.mxu0
      %v2243 = vrcp.pop %v1765
      %v2244 = vrcp.pop %v1770
      %v2245 = vrcp.pop %v1775
      %v2246 = vrcp.pop %v1780
      %v2247 = vrcp.pop %v1785
      %v2248 = vrcp.pop %v1790
      %v2249 = vrcp.pop %v1795
      %v2250 = vrcp.pop %v1800
      %v2251 = vrcp.pop %v1805
      %v2252 = vrcp.pop %v1810
      %v2253 = vrcp.pop %v1815
      %v2254 = vrcp.pop %v1820
      %v2255 = vrcp.pop %v1825
      %v2256 = vrcp.pop %v1830
      %v2257 = vrcp.pop %v1835
      %v2258 = vrcp.pop %v1840
      %v2259 = vrcp.pop %v1845
      %v2260 = vrcp.pop %v1850
      %v2261 = vrcp.pop %v1855
      %v2262 = vrcp.pop %v1860
      %v2263 = vrcp.pop %v1865
      %v2264 = vrcp.pop %v1870
      %v2265 = vrcp.pop %v1875
      %v2266 = vrcp.pop %v1880
      %v2267 = vrcp.pop %v1885
      %v2268 = vrcp.pop %v1890
      %v2269 = vrcp.pop %v1895
      %v2270 = vrcp.pop %v1900
      %v2271 = vrcp.pop %v1905
      %v2272 = vrcp.pop %v1910
      %v2273 = vrcp.pop %v1915
      %v2274 = vrcp.pop %v1920
      %v2275 = vmul.f32 %v2117, %v2243
      %v2276 = vmul.f32 %v2120, %v2244
      %v2277 = vmul.f32 %v2125, %v2245
      %v2278 = vmul.f32 %v2128, %v2246
      %v2279 = vmul.f32 %v2133, %v2247
      %v2280 = vmul.f32 %v2136, %v2248
      %v2281 = vmul.f32 %v2141, %v2249
      %v2282 = vmul.f32 %v2144, %v2250
      %v2283 = vmul.f32 %v2149, %v2251
      %v2284 = vmul.f32 %v2152, %v2252
      %v2285 = vmul.f32 %v2157, %v2253
      %v2286 = vmul.f32 %v2160, %v2254
      %v2287 = vmul.f32 %v2165, %v2255
      %v2288 = vmul.f32 %v2168, %v2256
      %v2289 = vmul.f32 %v2173, %v2257
      %v2290 = vmul.f32 %v2176, %v2258
      %v2291 = vmul.f32 %v2181, %v2259
      %v2292 = vmul.f32 %v2184, %v2260
      %v2293 = vmul.f32 %v2189, %v2261
      %v2294 = vmul.f32 %v2192, %v2262
      %v2295 = vmul.f32 %v2197, %v2263
      %v2296 = vmul.f32 %v2200, %v2264
      %v2297 = vmul.f32 %v2205, %v2265
      %v2298 = vmul.f32 %v2208, %v2266
      %v2299 = vmul.f32 %v2213, %v2267
      %v2300 = vmul.f32 %v2216, %v2268
      %v2301 = vmul.f32 %v2221, %v2269
      %v2302 = vmul.f32 %v2224, %v2270
      %v2303 = vmul.f32 %v2229, %v2271
      %v2304 = vmul.f32 %v2232, %v2272
      %v2305 = vmul.f32 %v2237, %v2273
      %v2306 = vmul.f32 %v2240, %v2274
      %v2307 = vld [vmem:[%s2] sm:$0x3]
      %v2308 = vpack.c.bf16 %v2276, %v2275
      %v2309 = vpack.c.bf16 %v2278, %v2277
      %v2310 = vpack.c.bf16 %v2280, %v2279
      %v2311 = vpack.c.bf16 %v2282, %v2281
      %v2312 = vpack.c.bf16 %v2284, %v2283
      %v2313 = vpack.c.bf16 %v2286, %v2285
      %v2314 = vpack.c.bf16 %v2288, %v2287
      %v2315 = vpack.c.bf16 %v2290, %v2289
      %v2316 = vpack.c.bf16 %v2292, %v2291
      %v2317 = vpack.c.bf16 %v2294, %v2293
      %v2318 = vpack.c.bf16 %v2296, %v2295
      %v2319 = vpack.c.bf16 %v2298, %v2297
      %v2320 = vpack.c.bf16 %v2300, %v2299
      %v2321 = vpack.c.bf16 %v2302, %v2301
      %v2322 = vpack.c.bf16 %v2304, %v2303
      %v2323 = vpack.c.bf16 %v2306, %v2305
      %v2324 = vld [vmem:[%s3 + $0x30] sm:$0xf]
      %2326 = vset.pattern.permute.xlu0 0
      %2327 = vperm.xlu0 %2326, %v2324
      %v2328 = vpop.permute.xlu0 %2327
      %v2331 = vsel %vm654, %v2307, 0
      %v2334 = vsel %vm654, %v2308, 0
      %v2337 = vsel %vm654, %v2309, 0
      %v2340 = vsel %vm654, %v2310, 0
      %v2343 = vsel %vm654, %v2311, 0
      %v2346 = vsel %vm654, %v2312, 0
      %v2349 = vsel %vm654, %v2313, 0
      %v2352 = vsel %vm654, %v2314, 0
      %v2355 = vsel %vm654, %v2315, 0
      %v2358 = vsel %vm654, %v2316, 0
      %v2361 = vsel %vm654, %v2317, 0
      %v2364 = vsel %vm654, %v2318, 0
      %v2367 = vsel %vm654, %v2319, 0
      %v2370 = vsel %vm654, %v2320, 0
      %v2373 = vsel %vm654, %v2321, 0
      %v2376 = vsel %vm654, %v2322, 0
      %v2379 = vsel %vm654, %v2323, 0
      %2381 = vmatprep.subr.bf16.mxu0 0
      %2382 = vmatpush1.bf16.xpose.msra.mxu0 %v2334
      %2383 = vmatprep.subr.bf16.mxu0 0
      %2384 = vmatpush1.bf16.xpose.msra.mxu0 %v2337
      %2385 = vmatprep.subr.bf16.mxu0 0
      %2386 = vmatpush1.bf16.xpose.msra.mxu0 %v2340
      %2387 = vmatprep.subr.bf16.mxu0 0
      %2388 = vmatpush1.bf16.xpose.msra.mxu0 %v2343
      %2389 = vmatprep.subr.bf16.mxu0 0
      %2390 = vmatpush1.bf16.xpose.msra.mxu0 %v2346
      %2391 = vmatprep.subr.bf16.mxu0 0
      %2392 = vmatpush1.bf16.xpose.msra.mxu0 %v2349
      %2393 = vmatprep.subr.bf16.mxu0 0
      %2394 = vmatpush1.bf16.xpose.msra.mxu0 %v2352
      %2395 = vmatprep.subr.bf16.mxu0 0
      %2396 = vmatpush1.bf16.xpose.msra.mxu0 %v2355
      %2397 = vmatprep.subr.bf16.mxu0 0
      %2398 = vmatpush1.bf16.xpose.msra.mxu0 %v2358
      %2399 = vmatprep.subr.bf16.mxu0 0
      %2400 = vmatpush1.bf16.xpose.msra.mxu0 %v2361
      %2401 = vmatprep.subr.bf16.mxu0 0
      %2402 = vmatpush1.bf16.xpose.msra.mxu0 %v2364
      %2403 = vmatprep.subr.bf16.mxu0 0
      %2404 = vmatpush1.bf16.xpose.msra.mxu0 %v2367
      %2405 = vmatprep.subr.bf16.mxu0 0
      %2406 = vmatpush1.bf16.xpose.msra.mxu0 %v2370
      %2407 = vmatprep.subr.bf16.mxu0 0
      %2408 = vmatpush1.bf16.xpose.msra.mxu0 %v2373
      %2409 = vmatprep.subr.bf16.mxu0 0
      %2410 = vmatpush1.bf16.xpose.msra.mxu0 %v2376
      %2411 = vmatprep.subr.bf16.mxu0 0
      %2412 = vmatpush1.bf16.xpose.msra.mxu0 %v2379
      %2413 = vmatprep.mubr.bf16.mxu0 0
      %2414 = vmatmul.mubr.bf16.gmra.mrb[0].mxu0 %v2331
      %v2415 = vpop.f32.mrb[0].mxu0
      %v2416 = vadd.f32 %v2328, %v2415
      %v2417 = vpop.f32.mrb[0].mxu0
      %v2418 = vadd.f32 %v2328, %v2417
      %v2419 = vpop.f32.mrb[0].mxu0
      %v2420 = vpop.f32.mrb[0].mxu0
      %2421 = vdwg.mxu0
      %s2422 = smul.addr %s612, 2
      %s2423 = scalar_lea.vmem %s210, %s2422
      %v2424 = vld [vmem:[%s2423] sm:$0xf]
      %v2425 = vunpack.c.l.bf16 %v2424
      %v2428 = vcombine.low %v2416, %v2418
      %v2430 = vadd.f32 %v2425, %v2428
      %v2432 = vcombine.high %v2430, %v2430
      %v2434 = vpack.c.bf16 %v2430, %v2430
      %v2435 = vpack.c.bf16 %v2432, %v2432
      %v2438 = vcombine.low %v2434, %v2435
      %v2440 = vunpack.c.l.s4 1983009808
      %v2441 = vunpack.c.0.s8 %v2440
      %v2442 = vlaneseq
      %v2443 = vshrl.u32 %v2442, 7
      %v2444 = vsub.s32 %v2441, %v2443
      %v2445 = vrot.slane %v2438, %v2444
      %2447 = vst [vmem:[%s219] sm:$0xf] %v2445
      %s2448 = smul.u32 2, %s20
      %p2449 = scmp.lt.s32.totalorder %s19, 1
      %s2450 = scalar_select %p2449, %s19, 1
      %p2451 = scmp.lt.s32.totalorder %s2448, 3
      %s2452 = scalar_select %p2451, %s2448, 3
      %s2453 = smul.addr %s2450, 4
      %s2454 = sadd.s32 %s2452, %s2453
      %s2455 = smul.addr %s2454, 2
      %s2456 = scalar_lea.vmem %s4, %s2455
      // Predicated region
      $region41: #{nonlocal_forward.1} parent=35 // pred_check
        %p2457 = pneg %p136
      $region42: #{nonlocal_forward.1} parent=35 // pred_check_branch
        %2459 = sbr.rel (%p2457) target = $region44
      $region43: #{nonlocal_forward.1} parent=35 // pred_region
        %s2460 = smul.u32 2, %s20
      $region44: #{nonlocal_forward.1} parent=35 // pred_fallthru
        _
    $region36: #{nonlocal_forward.1} parent=5 // pred_fallthru
      _
    %p2461 = scmp.le.s32.totalorder 2, %s10
    // Predicated region
    $region45: #{nonlocal_forward.1} parent=5 // pred_check
      %p2462 = pneg %p2461
    $region46: #{nonlocal_forward.1} parent=5 // pred_check_branch
      %2464 = sbr.rel (%p2462) target = $region48
    $region47: #{nonlocal_forward.1} parent=5 // pred_region
      %s2465 = ssub.s32 %s10, 2
      // Predicated region
      $region49: #{nonlocal_forward.1} parent=47 // pred_check
        %p2466 = pneg %p142
      $region50: #{nonlocal_forward.1} parent=47 // pred_check_branch
        %2468 = sbr.rel (%p2466) target = $region52
      $region51: #{nonlocal_forward.1} parent=47 // pred_region
        %s2469 = smul.u32 2, %s22
        %p2470 = scmp.lt.s32.totalorder %s21, 1
        %s2471 = scalar_select %p2470, %s21, 1
        %p2472 = scmp.lt.s32.totalorder %s2469, 3
        %s2473 = scalar_select %p2472, %s2469, 3
        %s2474 = smul.addr %s2471, 4
        %s2475 = sadd.s32 %s2473, %s2474
        %s2476 = smul.addr %s2475, 2
        %s2477 = scalar_lea.vmem %s4, %s2476
      $region52: #{nonlocal_forward.1} parent=47 // pred_fallthru
        _
    $region48: #{nonlocal_forward.1} parent=5 // pred_fallthru
      _
  $region6: #{nonlocal_forward.1} parent=0 // loop_footer
    %s14 = sadd.s32 1, %s10
  $region7: #{nonlocal_forward.1} parent=0 // loop_footer_branch
    %9 = sbr.rel target = $region3
  $region8: #{nonlocal_forward.1} parent=0 // loop_exit
    _

</llo_original>
